<compile_context>
chip_gen: v7x
topology: tpu7x:2x2x1
jax: 0.10.0
libtpu: 0.0.40
codegen_flags: <defaults>
</compile_context>

<pallas_src>
import functools

import jax
import jax.numpy as jnp
from jax.experimental import pallas as pl
from jax.experimental.pallas import tpu as pltpu


# ---------------------------------------------------------------------------
# Kernel 1: fused EMD branch (cost matrix + auction + matched-cost reduction)
# ---------------------------------------------------------------------------
def _emd_auction_kernel(x_ref, gtt_ref, out_ref, *, eps, iters, radius):
    # x_ref: (N, C) pred points; gtt_ref: (C, N) gt coordinate planes
    # out_ref: (1, 1) per-batch EMD loss
    n, c = x_ref.shape
    neg_inf = jnp.float32(-1e30)

    # --- squared-distance cost matrix, pure VPU (no K=3 MXU matmul) --------
    cost = jnp.zeros((n, n), jnp.float32)
    for ci in range(c):
        xc = x_ref[:, ci:ci + 1].astype(jnp.float32)      # (N, 1)
        gc = gtt_ref[ci:ci + 1, :].astype(jnp.float32)    # (1, N)
        diff = xc - gc
        cost = cost + diff * diff                         # exact, >= 0
    benefit = -cost

    col_ids = jax.lax.broadcasted_iota(jnp.int32, (n, n), 1)
    row_ids = jax.lax.broadcasted_iota(jnp.int32, (n, n), 0)

    def body(_, state):
        prices, owner = state          # (1, N) f32 ; (1, N) i32 (owner[j] = bidder or -1)

        # assigned[i] = bidder i currently owns some object (VMEM-resident compare)
        own_match = (owner == row_ids)                                       # (N, N)
        assigned = jnp.max(own_match.astype(jnp.float32), axis=1,
                           keepdims=True) > 0.5                              # (N, 1)

        values = benefit - prices                                            # (N, N)
        v1 = jnp.max(values, axis=1, keepdims=True)                          # (N, 1)
        # first column reaching the max (lowest-index tie break)
        best_j = jnp.min(jnp.where(values >= v1, col_ids, n),
                         axis=1, keepdims=True)                              # (N, 1)
        onehot = col_ids == best_j                                           # (N, N)
        v2 = jnp.max(jnp.where(onehot, neg_inf, values), axis=1, keepdims=True)
        price_best = jnp.sum(jnp.where(onehot, prices, 0.0),
                             axis=1, keepdims=True)                          # (N, 1)

        bid = v1 + price_best - v2 + jnp.float32(eps)                        # (N, 1)
        bid = jnp.where(assigned, neg_inf, bid)                              # only unassigned bid

        bid_mat = jnp.where(onehot, bid, neg_inf)                            # (N, N)
        win_bid = jnp.max(bid_mat, axis=0, keepdims=True)                    # (1, N)
        has_bid = win_bid > (neg_inf * 0.5)
        winner_mask = jnp.logical_and(bid_mat >= win_bid, bid_mat > neg_inf * 0.5)
        win_row = jnp.min(jnp.where(winner_mask, row_ids, n),
                          axis=0, keepdims=True)                             # (1, N) i32

        prices = jnp.where(has_bid, win_bid, prices)
        owner = jnp.where(has_bid, win_row, owner)
        return prices, owner

    prices0 = jnp.zeros((1, n), jnp.float32)
    owner0 = jnp.full((1, n), -1, jnp.int32)
    _, owner = jax.lax.fori_loop(0, iters, body, (prices0, owner0))

    # matched squared distance per pred point i: cost[i, j] where owner[j] == i
    match = (owner == row_ids)                                               # (N, N)
    has_match = jnp.max(match.astype(jnp.float32), axis=1, keepdims=True) > 0.5
    matched_cost = jnp.sum(jnp.where(match, cost, 0.0), axis=1, keepdims=True)
    fallback = jnp.min(cost, axis=1, keepdims=True)      # unconverged bidders
    per_point = jnp.where(has_match, matched_cost, fallback)                 # (N, 1)

    total = jnp.sum(per_point, axis=0, keepdims=True)                        # (1, 1)
    out_ref[...] = total / jnp.float32(n * c * radius)


def emd_loss_per_batch(x, gt_t, *, eps, iters, radius):
    B, N, C = x.shape
    return pl.pallas_call(
        functools.partial(_emd_auction_kernel, eps=eps, iters=iters, radius=radius),
        out_shape=jax.ShapeDtypeStruct((B, 1, 1), jnp.float32),
        grid=(B,),
        in_specs=[
            pl.BlockSpec((None, N, C), lambda b: (b, 0, 0)),
            pl.BlockSpec((None, C, N), lambda b: (b, 0, 0)),
        ],
        out_specs=pl.BlockSpec((None, 1, 1), lambda b: (b, 0, 0)),
        compiler_params=pltpu.CompilerParams(dimension_semantics=("parallel",)),
    )(x, gt_t)


# ---------------------------------------------------------------------------
# Kernel 2: fused self-pairwise distances + running k-min (for RepulsionLoss)
# ---------------------------------------------------------------------------
def _self_knn_kernel(x_ref, xt_ref, knn_ref, acc_ref, *, k):
    # x_ref: (tm, C) row tile; xt_ref: (C, tn) column tile of the same cloud
    # knn_ref: (tm, k) k smallest squared distances per row (ascending; col 0 = self)
    # acc_ref: (tm, k) running k-min accumulator (VMEM scratch)
    j = pl.program_id(2)
    tm, c = x_ref.shape
    tn = xt_ref.shape[1]

    @pl.when(j == 0)
    def _():
        acc_ref[...] = jnp.full((tm, k), jnp.inf, jnp.float32)

    # squared distances for this (tm, tn) tile, pure VPU from coordinate planes
    d = jnp.zeros((tm, tn), jnp.float32)
    for ci in range(c):
        xc = x_ref[:, ci:ci + 1].astype(jnp.float32)     # (tm, 1)
        yc = xt_ref[ci:ci + 1, :].astype(jnp.float32)    # (1, tn)
        diff = xc - yc
        d = d + diff * diff

    # merge tile into the running k smallest (exact; first-occurrence tie break)
    cand = jnp.concatenate([acc_ref[...], d], axis=1)    # (tm, k + tn)
    width = k + tn
    cand_cols = jax.lax.broadcasted_iota(jnp.int32, (tm, width), 1)
    mins = []
    for _ in range(k):
        m = jnp.min(cand, axis=1, keepdims=True)         # (tm, 1)
        mins.append(m)
        first = jnp.min(jnp.where(cand <= m, cand_cols, width),
                        axis=1, keepdims=True)
        cand = jnp.where(cand_cols == first, jnp.inf, cand)
    acc_ref[...] = jnp.concatenate(mins, axis=1)         # ascending

    @pl.when(j == pl.num_programs(2) - 1)
    def _():
        knn_ref[...] = acc_ref[...]


def _pick_tile(n, cap, align):
    """Largest tile <= cap that divides n and is a multiple of `align`;
    falls back to the whole axis (full-dim blocks are always legal)."""
    if n <= cap:
        return n
    t = (cap // align) * align
    while t >= align:
        if n % t == 0:
            return t
        t -= align
    return n


def self_knn_sqdist(x, x_t, k):
    B, N, C = x.shape
    tm = _pick_tile(N, 256, 8)       # sublane-aligned row tile
    tn = _pick_tile(N, 512, 128)     # lane-aligned column tile
    grid = (B, N // tm, N // tn)     # reduction (column) axis last
    return pl.pallas_call(
        functools.partial(_self_knn_kernel, k=k),
        out_shape=jax.ShapeDtypeStruct((B, N, k), jnp.float32),
        grid=grid,
        in_specs=[
            pl.BlockSpec((None, tm, C), lambda b, i, j: (b, i, 0)),
            pl.BlockSpec((None, C, tn), lambda b, i, j: (b, 0, j)),
        ],
        out_specs=pl.BlockSpec((None, tm, k), lambda b, i, j: (b, i, 0)),
        scratch_shapes=[pltpu.VMEM((tm, k), jnp.float32)],
        compiler_params=pltpu.CompilerParams(
            dimension_semantics=("parallel", "parallel", "arbitrary")),
    )(x, x_t)


# ---------------------------------------------------------------------------
# Full Loss_fn forward
# ---------------------------------------------------------------------------
def loss_fn(x, gt, *, k=10, h=0.0005, lambda_cd=1.0, lambda_rl=1.0, radius=1.0,
            auction_eps=1e-3, auction_iters=300):
    # coordinate-plane (lane-dense) layouts hoisted once and shared
    x_t = jnp.transpose(x, (0, 2, 1))     # (B, C, N)
    gt_t = jnp.transpose(gt, (0, 2, 1))   # (B, C, N)

    # --- "CD" (EMD-style) branch: one fused Pallas kernel per batch ---------
    per_batch_cd = emd_loss_per_batch(x, gt_t, eps=auction_eps,
                                      iters=auction_iters, radius=radius)
    loss_cd = jnp.mean(per_batch_cd)

    # --- Repulsion branch: fused pairwise + running k-min -------------------
    knn_d2 = self_knn_sqdist(x, x_t, k)          # (B, N, k), ascending, col 0 = self
    d2 = knn_d2[:, :, 1:]                        # drop self, (B, N, k-1)
    # (KNN returns distances which the PyTorch code squares back, so using the
    #  squared distances directly is semantically identical.)
    loss_rl = jnp.mean(jnp.maximum(h - d2, 0.0))  # trivial reduction: plain XLA

    return loss_cd * lambda_cd, loss_rl * lambda_rl


if __name__ == "__main__":
    key = jax.random.PRNGKey(0)
    kx, kg = jax.random.split(key)
    B, N = 2, 16                     # small point clouds, N >= k
    x = jax.random.normal(kx, (B, N, 3), dtype=jnp.float32)
    gt = jax.random.normal(kg, (B, N, 3), dtype=jnp.float32)

    loss_cd, loss_rl = jax.jit(loss_fn)(x, gt)
    jax.block_until_ready((loss_cd, loss_rl))
    print("KERNEL_OK")
</pallas_src>

<mosaic_0001>
module attributes {stable_mosaic.version = 11 : i64} {
  func.func @_self_knn_kernel(%arg0: i32, %arg1: i32, %arg2: i32, %arg3: memref<1x16x3xf32, #tpu.memory_space<vmem>>, %arg4: memref<1x3x16xf32, #tpu.memory_space<vmem>>, %arg5: memref<1x16x10xf32, #tpu.memory_space<vmem>>, %arg6: memref<16x10xf32, #tpu.memory_space<vmem>>) attributes {dimension_semantics = [#tpu.dimension_semantics<parallel>, #tpu.dimension_semantics<parallel>, #tpu.dimension_semantics<arbitrary>], iteration_bounds = array<i64: 2, 1, 1>, scalar_prefetch = 0 : i64, scratch_operands = 1 : i64, tpu.core_type = #tpu.core_type<tc>, window_params = [{transform_indices = @transform_0, window_bounds = array<i64: 1, 16, 3>}, {transform_indices = @transform_1, window_bounds = array<i64: 1, 3, 16>}, {transform_indices = @transform_2, window_bounds = array<i64: 1, 16, 10>}]} {
    %c0_i32 = arith.constant 0 : i32
    %0 = arith.cmpi eq, %arg2, %c0_i32 : i32
    %1 = arith.extui %0 : i1 to i32
    %c0_i32_0 = arith.constant 0 : i32
    %2 = arith.cmpi ne, %1, %c0_i32_0 : i32
    scf.if %2 {
      %cst_58 = arith.constant 0x7F800000 : f32
      %149 = vector.broadcast %cst_58 : f32 to vector<16x10xf32>
      %c0_59 = arith.constant 0 : index
      %c0_60 = arith.constant 0 : index
      %150 = vector.load %arg6[%c0_59, %c0_60] : memref<16x10xf32, #tpu.memory_space<vmem>>, vector<16x10xf32>
      tpu.vector_store %arg6[%c0_59, %c0_60], %149 {strides = array<i32>} : memref<16x10xf32, #tpu.memory_space<vmem>>, vector<16x10xf32>,
    } else {
    }
    %cst = arith.constant 0.000000e+00 : f32
    %3 = vector.broadcast %cst : f32 to vector<16x16xf32>
    %c0 = arith.constant 0 : index
    %c0_1 = arith.constant 0 : index
    %c0_2 = arith.constant 0 : index
    %4 = vector.load %arg3[%c0, %c0_1, %c0_2] : memref<1x16x3xf32, #tpu.memory_space<vmem>>, vector<1x16x1xf32>
    %5 = vector.shape_cast %4 : vector<1x16x1xf32> to vector<16x1xf32>
    %c0_3 = arith.constant 0 : index
    %c0_4 = arith.constant 0 : index
    %c0_5 = arith.constant 0 : index
    %6 = vector.load %arg4[%c0_3, %c0_4, %c0_5] : memref<1x3x16xf32, #tpu.memory_space<vmem>>, vector<1x1x16xf32>
    %7 = vector.shape_cast %6 : vector<1x1x16xf32> to vector<1x16xf32>
    %8 = vector.broadcast %5 : vector<16x1xf32> to vector<16x16xf32>
    %9 = vector.broadcast %7 : vector<1x16xf32> to vector<16x16xf32>
    %10 = arith.subf %8, %9 : vector<16x16xf32>
    %11 = arith.mulf %10, %10 : vector<16x16xf32>
    %12 = arith.addf %3, %11 : vector<16x16xf32>
    %c0_6 = arith.constant 0 : index
    %c0_7 = arith.constant 0 : index
    %c1 = arith.constant 1 : index
    %13 = vector.load %arg3[%c0_6, %c0_7, %c1] : memref<1x16x3xf32, #tpu.memory_space<vmem>>, vector<1x16x1xf32>
    %14 = vector.shape_cast %13 : vector<1x16x1xf32> to vector<16x1xf32>
    %c0_8 = arith.constant 0 : index
    %c1_9 = arith.constant 1 : index
    %c0_10 = arith.constant 0 : index
    %15 = vector.load %arg4[%c0_8, %c1_9, %c0_10] : memref<1x3x16xf32, #tpu.memory_space<vmem>>, vector<1x1x16xf32>
    %16 = vector.shape_cast %15 : vector<1x1x16xf32> to vector<1x16xf32>
    %17 = vector.broadcast %14 : vector<16x1xf32> to vector<16x16xf32>
    %18 = vector.broadcast %16 : vector<1x16xf32> to vector<16x16xf32>
    %19 = arith.subf %17, %18 : vector<16x16xf32>
    %20 = arith.mulf %19, %19 : vector<16x16xf32>
    %21 = arith.addf %12, %20 : vector<16x16xf32>
    %c0_11 = arith.constant 0 : index
    %c0_12 = arith.constant 0 : index
    %c2 = arith.constant 2 : index
    %22 = vector.load %arg3[%c0_11, %c0_12, %c2] : memref<1x16x3xf32, #tpu.memory_space<vmem>>, vector<1x16x1xf32>
    %23 = vector.shape_cast %22 : vector<1x16x1xf32> to vector<16x1xf32>
    %c0_13 = arith.constant 0 : index
    %c2_14 = arith.constant 2 : index
    %c0_15 = arith.constant 0 : index
    %24 = vector.load %arg4[%c0_13, %c2_14, %c0_15] : memref<1x3x16xf32, #tpu.memory_space<vmem>>, vector<1x1x16xf32>
    %25 = vector.shape_cast %24 : vector<1x1x16xf32> to vector<1x16xf32>
    %26 = vector.broadcast %23 : vector<16x1xf32> to vector<16x16xf32>
    %27 = vector.broadcast %25 : vector<1x16xf32> to vector<16x16xf32>
    %28 = arith.subf %26, %27 : vector<16x16xf32>
    %29 = arith.mulf %28, %28 : vector<16x16xf32>
    %30 = arith.addf %21, %29 : vector<16x16xf32>
    %c0_16 = arith.constant 0 : index
    %c0_17 = arith.constant 0 : index
    %31 = vector.load %arg6[%c0_16, %c0_17] : memref<16x10xf32, #tpu.memory_space<vmem>>, vector<16x10xf32>
    %32 = tpu.concatenate %31, %30 in 1 : vector<16x10xf32>, vector<16x16xf32> -> vector<16x26xf32>
    %33 = tpu.iota {dimensions = array<i32: 1>} : vector<16x26xi32>
    %cst_18 = arith.constant dense<0x7F800000> : vector<16xf32>
    %34 = vector.multi_reduction <minimumf>, %32, %cst_18 [1] : vector<16x26xf32> to vector<16xf32>
    %35 = vector.shape_cast %34 : vector<16xf32> to vector<16x1xf32>
    %36 = vector.broadcast %35 : vector<16x1xf32> to vector<16x26xf32>
    %37 = arith.cmpf ole, %32, %36 : vector<16x26xf32>
    %c26_i32 = arith.constant 26 : i32
    %38 = vector.broadcast %c26_i32 : i32 to vector<16x26xi32>
    %39 = arith.select %37, %33, %38 : vector<16x26xi1>, vector<16x26xi32>
    %cst_19 = arith.constant dense<2147483647> : vector<16xi32>
    %40 = vector.multi_reduction <minsi>, %39, %cst_19 [1] : vector<16x26xi32> to vector<16xi32>
    %41 = vector.shape_cast %40 : vector<16xi32> to vector<16x1xi32>
    %42 = vector.broadcast %41 : vector<16x1xi32> to vector<16x26xi32>
    %43 = arith.cmpi eq, %33, %42 : vector<16x26xi32>
    %cst_20 = arith.constant 0x7F800000 : f32
    %44 = vector.broadcast %cst_20 : f32 to vector<16x26xf32>
    %45 = arith.select %43, %44, %32 : vector<16x26xi1>, vector<16x26xf32>
    %cst_21 = arith.constant dense<0x7F800000> : vector<16xf32>
    %46 = vector.multi_reduction <minimumf>, %45, %cst_21 [1] : vector<16x26xf32> to vector<16xf32>
    %47 = vector.shape_cast %46 : vector<16xf32> to vector<16x1xf32>
    %48 = vector.broadcast %47 : vector<16x1xf32> to vector<16x26xf32>
    %49 = arith.cmpf ole, %45, %48 : vector<16x26xf32>
    %c26_i32_22 = arith.constant 26 : i32
    %50 = vector.broadcast %c26_i32_22 : i32 to vector<16x26xi32>
    %51 = arith.select %49, %33, %50 : vector<16x26xi1>, vector<16x26xi32>
    %cst_23 = arith.constant dense<2147483647> : vector<16xi32>
    %52 = vector.multi_reduction <minsi>, %51, %cst_23 [1] : vector<16x26xi32> to vector<16xi32>
    %53 = vector.shape_cast %52 : vector<16xi32> to vector<16x1xi32>
    %54 = vector.broadcast %53 : vector<16x1xi32> to vector<16x26xi32>
    %55 = arith.cmpi eq, %33, %54 : vector<16x26xi32>
    %cst_24 = arith.constant 0x7F800000 : f32
    %56 = vector.broadcast %cst_24 : f32 to vector<16x26xf32>
    %57 = arith.select %55, %56, %45 : vector<16x26xi1>, vector<16x26xf32>
    %cst_25 = arith.constant dense<0x7F800000> : vector<16xf32>
    %58 = vector.multi_reduction <minimumf>, %57, %cst_25 [1] : vector<16x26xf32> to vector<16xf32>
    %59 = vector.shape_cast %58 : vector<16xf32> to vector<16x1xf32>
    %60 = vector.broadcast %59 : vector<16x1xf32> to vector<16x26xf32>
    %61 = arith.cmpf ole, %57, %60 : vector<16x26xf32>
    %c26_i32_26 = arith.constant 26 : i32
    %62 = vector.broadcast %c26_i32_26 : i32 to vector<16x26xi32>
    %63 = arith.select %61, %33, %62 : vector<16x26xi1>, vector<16x26xi32>
    %cst_27 = arith.constant dense<2147483647> : vector<16xi32>
    %64 = vector.multi_reduction <minsi>, %63, %cst_27 [1] : vector<16x26xi32> to vector<16xi32>
    %65 = vector.shape_cast %64 : vector<16xi32> to vector<16x1xi32>
    %66 = vector.broadcast %65 : vector<16x1xi32> to vector<16x26xi32>
    %67 = arith.cmpi eq, %33, %66 : vector<16x26xi32>
    %cst_28 = arith.constant 0x7F800000 : f32
    %68 = vector.broadcast %cst_28 : f32 to vector<16x26xf32>
    %69 = arith.select %67, %68, %57 : vector<16x26xi1>, vector<16x26xf32>
    %cst_29 = arith.constant dense<0x7F800000> : vector<16xf32>
    %70 = vector.multi_reduction <minimumf>, %69, %cst_29 [1] : vector<16x26xf32> to vector<16xf32>
    %71 = vector.shape_cast %70 : vector<16xf32> to vector<16x1xf32>
    %72 = vector.broadcast %71 : vector<16x1xf32> to vector<16x26xf32>
    %73 = arith.cmpf ole, %69, %72 : vector<16x26xf32>
    %c26_i32_30 = arith.constant 26 : i32
    %74 = vector.broadcast %c26_i32_30 : i32 to vector<16x26xi32>
    %75 = arith.select %73, %33, %74 : vector<16x26xi1>, vector<16x26xi32>
    %cst_31 = arith.constant dense<2147483647> : vector<16xi32>
    %76 = vector.multi_reduction <minsi>, %75, %cst_31 [1] : vector<16x26xi32> to vector<16xi32>
    %77 = vector.shape_cast %76 : vector<16xi32> to vector<16x1xi32>
    %78 = vector.broadcast %77 : vector<16x1xi32> to vector<16x26xi32>
    %79 = arith.cmpi eq, %33, %78 : vector<16x26xi32>
    %cst_32 = arith.constant 0x7F800000 : f32
    %80 = vector.broadcast %cst_32 : f32 to vector<16x26xf32>
    %81 = arith.select %79, %80, %69 : vector<16x26xi1>, vector<16x26xf32>
    %cst_33 = arith.constant dense<0x7F800000> : vector<16xf32>
    %82 = vector.multi_reduction <minimumf>, %81, %cst_33 [1] : vector<16x26xf32> to vector<16xf32>
    %83 = vector.shape_cast %82 : vector<16xf32> to vector<16x1xf32>
    %84 = vector.broadcast %83 : vector<16x1xf32> to vector<16x26xf32>
    %85 = arith.cmpf ole, %81, %84 : vector<16x26xf32>
    %c26_i32_34 = arith.constant 26 : i32
    %86 = vector.broadcast %c26_i32_34 : i32 to vector<16x26xi32>
    %87 = arith.select %85, %33, %86 : vector<16x26xi1>, vector<16x26xi32>
    %cst_35 = arith.constant dense<2147483647> : vector<16xi32>
    %88 = vector.multi_reduction <minsi>, %87, %cst_35 [1] : vector<16x26xi32> to vector<16xi32>
    %89 = vector.shape_cast %88 : vector<16xi32> to vector<16x1xi32>
    %90 = vector.broadcast %89 : vector<16x1xi32> to vector<16x26xi32>
    %91 = arith.cmpi eq, %33, %90 : vector<16x26xi32>
    %cst_36 = arith.constant 0x7F800000 : f32
    %92 = vector.broadcast %cst_36 : f32 to vector<16x26xf32>
    %93 = arith.select %91, %92, %81 : vector<16x26xi1>, vector<16x26xf32>
    %cst_37 = arith.constant dense<0x7F800000> : vector<16xf32>
    %94 = vector.multi_reduction <minimumf>, %93, %cst_37 [1] : vector<16x26xf32> to vector<16xf32>
    %95 = vector.shape_cast %94 : vector<16xf32> to vector<16x1xf32>
    %96 = vector.broadcast %95 : vector<16x1xf32> to vector<16x26xf32>
    %97 = arith.cmpf ole, %93, %96 : vector<16x26xf32>
    %c26_i32_38 = arith.constant 26 : i32
    %98 = vector.broadcast %c26_i32_38 : i32 to vector<16x26xi32>
    %99 = arith.select %97, %33, %98 : vector<16x26xi1>, vector<16x26xi32>
    %cst_39 = arith.constant dense<2147483647> : vector<16xi32>
    %100 = vector.multi_reduction <minsi>, %99, %cst_39 [1] : vector<16x26xi32> to vector<16xi32>
    %101 = vector.shape_cast %100 : vector<16xi32> to vector<16x1xi32>
    %102 = vector.broadcast %101 : vector<16x1xi32> to vector<16x26xi32>
    %103 = arith.cmpi eq, %33, %102 : vector<16x26xi32>
    %cst_40 = arith.constant 0x7F800000 : f32
    %104 = vector.broadcast %cst_40 : f32 to vector<16x26xf32>
    %105 = arith.select %103, %104, %93 : vector<16x26xi1>, vector<16x26xf32>
    %cst_41 = arith.constant dense<0x7F800000> : vector<16xf32>
    %106 = vector.multi_reduction <minimumf>, %105, %cst_41 [1] : vector<16x26xf32> to vector<16xf32>
    %107 = vector.shape_cast %106 : vector<16xf32> to vector<16x1xf32>
    %108 = vector.broadcast %107 : vector<16x1xf32> to vector<16x26xf32>
    %109 = arith.cmpf ole, %105, %108 : vector<16x26xf32>
    %c26_i32_42 = arith.constant 26 : i32
    %110 = vector.broadcast %c26_i32_42 : i32 to vector<16x26xi32>
    %111 = arith.select %109, %33, %110 : vector<16x26xi1>, vector<16x26xi32>
    %cst_43 = arith.constant dense<2147483647> : vector<16xi32>
    %112 = vector.multi_reduction <minsi>, %111, %cst_43 [1] : vector<16x26xi32> to vector<16xi32>
    %113 = vector.shape_cast %112 : vector<16xi32> to vector<16x1xi32>
    %114 = vector.broadcast %113 : vector<16x1xi32> to vector<16x26xi32>
    %115 = arith.cmpi eq, %33, %114 : vector<16x26xi32>
    %cst_44 = arith.constant 0x7F800000 : f32
    %116 = vector.broadcast %cst_44 : f32 to vector<16x26xf32>
    %117 = arith.select %115, %116, %105 : vector<16x26xi1>, vector<16x26xf32>
    %cst_45 = arith.constant dense<0x7F800000> : vector<16xf32>
    %118 = vector.multi_reduction <minimumf>, %117, %cst_45 [1] : vector<16x26xf32> to vector<16xf32>
    %119 = vector.shape_cast %118 : vector<16xf32> to vector<16x1xf32>
    %120 = vector.broadcast %119 : vector<16x1xf32> to vector<16x26xf32>
    %121 = arith.cmpf ole, %117, %120 : vector<16x26xf32>
    %c26_i32_46 = arith.constant 26 : i32
    %122 = vector.broadcast %c26_i32_46 : i32 to vector<16x26xi32>
    %123 = arith.select %121, %33, %122 : vector<16x26xi1>, vector<16x26xi32>
    %cst_47 = arith.constant dense<2147483647> : vector<16xi32>
    %124 = vector.multi_reduction <minsi>, %123, %cst_47 [1] : vector<16x26xi32> to vector<16xi32>
    %125 = vector.shape_cast %124 : vector<16xi32> to vector<16x1xi32>
    %126 = vector.broadcast %125 : vector<16x1xi32> to vector<16x26xi32>
    %127 = arith.cmpi eq, %33, %126 : vector<16x26xi32>
    %cst_48 = arith.constant 0x7F800000 : f32
    %128 = vector.broadcast %cst_48 : f32 to vector<16x26xf32>
    %129 = arith.select %127, %128, %117 : vector<16x26xi1>, vector<16x26xf32>
    %cst_49 = arith.constant dense<0x7F800000> : vector<16xf32>
    %130 = vector.multi_reduction <minimumf>, %129, %cst_49 [1] : vector<16x26xf32> to vector<16xf32>
    %131 = vector.shape_cast %130 : vector<16xf32> to vector<16x1xf32>
    %132 = vector.broadcast %131 : vector<16x1xf32> to vector<16x26xf32>
    %133 = arith.cmpf ole, %129, %132 : vector<16x26xf32>
    %c26_i32_50 = arith.constant 26 : i32
    %134 = vector.broadcast %c26_i32_50 : i32 to vector<16x26xi32>
    %135 = arith.select %133, %33, %134 : vector<16x26xi1>, vector<16x26xi32>
    %cst_51 = arith.constant dense<2147483647> : vector<16xi32>
    %136 = vector.multi_reduction <minsi>, %135, %cst_51 [1] : vector<16x26xi32> to vector<16xi32>
    %137 = vector.shape_cast %136 : vector<16xi32> to vector<16x1xi32>
    %138 = vector.broadcast %137 : vector<16x1xi32> to vector<16x26xi32>
    %139 = arith.cmpi eq, %33, %138 : vector<16x26xi32>
    %cst_52 = arith.constant 0x7F800000 : f32
    %140 = vector.broadcast %cst_52 : f32 to vector<16x26xf32>
    %141 = arith.select %139, %140, %129 : vector<16x26xi1>, vector<16x26xf32>
    %cst_53 = arith.constant dense<0x7F800000> : vector<16xf32>
    %142 = vector.multi_reduction <minimumf>, %141, %cst_53 [1] : vector<16x26xf32> to vector<16xf32>
    %143 = vector.shape_cast %142 : vector<16xf32> to vector<16x1xf32>
    %144 = tpu.concatenate %35, %47, %59, %71, %83, %95, %107, %119, %131, %143 in 1 : vector<16x1xf32>, vector<16x1xf32>, vector<16x1xf32>, vector<16x1xf32>, vector<16x1xf32>, vector<16x1xf32>, vector<16x1xf32>, vector<16x1xf32>, vector<16x1xf32>, vector<16x1xf32> -> vector<16x10xf32>
    %c0_54 = arith.constant 0 : index
    %c0_55 = arith.constant 0 : index
    %145 = vector.load %arg6[%c0_54, %c0_55] : memref<16x10xf32, #tpu.memory_space<vmem>>, vector<16x10xf32>
    tpu.vector_store %arg6[%c0_54, %c0_55], %144 {strides = array<i32>} : memref<16x10xf32, #tpu.memory_space<vmem>>, vector<16x10xf32>,
    %c0_i32_56 = arith.constant 0 : i32
    %146 = arith.cmpi eq, %arg2, %c0_i32_56 : i32
    %147 = arith.extui %146 : i1 to i32
    %c0_i32_57 = arith.constant 0 : i32
    %148 = arith.cmpi ne, %147, %c0_i32_57 : i32
    scf.if %148 {
      %c0_58 = arith.constant 0 : index
      %c0_59 = arith.constant 0 : index
      %149 = vector.load %arg6[%c0_58, %c0_59] : memref<16x10xf32, #tpu.memory_space<vmem>>, vector<16x10xf32>
      %c0_60 = arith.constant 0 : index
      %c0_61 = arith.constant 0 : index
      %c0_62 = arith.constant 0 : index
      %150 = vector.load %arg5[%c0_60, %c0_61, %c0_62] : memref<1x16x10xf32, #tpu.memory_space<vmem>>, vector<1x16x10xf32>
      %151 = vector.shape_cast %150 : vector<1x16x10xf32> to vector<16x10xf32>
      %152 = vector.shape_cast %149 : vector<16x10xf32> to vector<1x16x10xf32>
      tpu.vector_store %arg5[%c0_60, %c0_61, %c0_62], %152 {strides = array<i32>} : memref<1x16x10xf32, #tpu.memory_space<vmem>>, vector<1x16x10xf32>,
    } else {
    }
    return
  }
  func.func @transform_0(%arg0: i32, %arg1: i32, %arg2: i32) -> (i32, i32, i32) {
    %c0_i32 = arith.constant 0 : i32
    %c0_i32_0 = arith.constant 0 : i32
    return %arg0, %arg1, %c0_i32 : i32, i32, i32
  }
  func.func @transform_1(%arg0: i32, %arg1: i32, %arg2: i32) -> (i32, i32, i32) {
    %c0_i32 = arith.constant 0 : i32
    %c0_i32_0 = arith.constant 0 : i32
    return %arg0, %c0_i32, %arg2 : i32, i32, i32
  }
  func.func @transform_2(%arg0: i32, %arg1: i32, %arg2: i32) -> (i32, i32, i32) {
    %c0_i32 = arith.constant 0 : i32
    %c0_i32_0 = arith.constant 0 : i32
    return %arg0, %arg1, %c0_i32 : i32, i32, i32
  }
}

module attributes {stable_mosaic.version = 11 : i64} {
  func.func @_emd_auction_kernel(%arg0: i32, %arg1: memref<1x16x3xf32, #tpu.memory_space<vmem>>, %arg2: memref<1x3x16xf32, #tpu.memory_space<vmem>>, %arg3: memref<1x1x1xf32, #tpu.memory_space<vmem>>) attributes {dimension_semantics = [#tpu.dimension_semantics<parallel>], iteration_bounds = array<i64: 2>, scalar_prefetch = 0 : i64, scratch_operands = 0 : i64, tpu.core_type = #tpu.core_type<tc>, window_params = [{transform_indices = @transform_0, window_bounds = array<i64: 1, 16, 3>}, {transform_indices = @transform_1, window_bounds = array<i64: 1, 3, 16>}, {transform_indices = @transform_2, window_bounds = array<i64: 1, 1, 1>}]} {
    %cst = arith.constant 0.000000e+00 : f32
    %0 = vector.broadcast %cst : f32 to vector<16x16xf32>
    %c0 = arith.constant 0 : index
    %c0_0 = arith.constant 0 : index
    %c0_1 = arith.constant 0 : index
    %1 = vector.load %arg1[%c0, %c0_0, %c0_1] : memref<1x16x3xf32, #tpu.memory_space<vmem>>, vector<1x16x1xf32>
    %2 = vector.shape_cast %1 : vector<1x16x1xf32> to vector<16x1xf32>
    %c0_2 = arith.constant 0 : index
    %c0_3 = arith.constant 0 : index
    %c0_4 = arith.constant 0 : index
    %3 = vector.load %arg2[%c0_2, %c0_3, %c0_4] : memref<1x3x16xf32, #tpu.memory_space<vmem>>, vector<1x1x16xf32>
    %4 = vector.shape_cast %3 : vector<1x1x16xf32> to vector<1x16xf32>
    %5 = vector.broadcast %2 : vector<16x1xf32> to vector<16x16xf32>
    %6 = vector.broadcast %4 : vector<1x16xf32> to vector<16x16xf32>
    %7 = arith.subf %5, %6 : vector<16x16xf32>
    %8 = arith.mulf %7, %7 : vector<16x16xf32>
    %9 = arith.addf %0, %8 : vector<16x16xf32>
    %c0_5 = arith.constant 0 : index
    %c0_6 = arith.constant 0 : index
    %c1 = arith.constant 1 : index
    %10 = vector.load %arg1[%c0_5, %c0_6, %c1] : memref<1x16x3xf32, #tpu.memory_space<vmem>>, vector<1x16x1xf32>
    %11 = vector.shape_cast %10 : vector<1x16x1xf32> to vector<16x1xf32>
    %c0_7 = arith.constant 0 : index
    %c1_8 = arith.constant 1 : index
    %c0_9 = arith.constant 0 : index
    %12 = vector.load %arg2[%c0_7, %c1_8, %c0_9] : memref<1x3x16xf32, #tpu.memory_space<vmem>>, vector<1x1x16xf32>
    %13 = vector.shape_cast %12 : vector<1x1x16xf32> to vector<1x16xf32>
    %14 = vector.broadcast %11 : vector<16x1xf32> to vector<16x16xf32>
    %15 = vector.broadcast %13 : vector<1x16xf32> to vector<16x16xf32>
    %16 = arith.subf %14, %15 : vector<16x16xf32>
    %17 = arith.mulf %16, %16 : vector<16x16xf32>
    %18 = arith.addf %9, %17 : vector<16x16xf32>
    %c0_10 = arith.constant 0 : index
    %c0_11 = arith.constant 0 : index
    %c2 = arith.constant 2 : index
    %19 = vector.load %arg1[%c0_10, %c0_11, %c2] : memref<1x16x3xf32, #tpu.memory_space<vmem>>, vector<1x16x1xf32>
    %20 = vector.shape_cast %19 : vector<1x16x1xf32> to vector<16x1xf32>
    %c0_12 = arith.constant 0 : index
    %c2_13 = arith.constant 2 : index
    %c0_14 = arith.constant 0 : index
    %21 = vector.load %arg2[%c0_12, %c2_13, %c0_14] : memref<1x3x16xf32, #tpu.memory_space<vmem>>, vector<1x1x16xf32>
    %22 = vector.shape_cast %21 : vector<1x1x16xf32> to vector<1x16xf32>
    %23 = vector.broadcast %20 : vector<16x1xf32> to vector<16x16xf32>
    %24 = vector.broadcast %22 : vector<1x16xf32> to vector<16x16xf32>
    %25 = arith.subf %23, %24 : vector<16x16xf32>
    %26 = arith.mulf %25, %25 : vector<16x16xf32>
    %27 = arith.addf %18, %26 : vector<16x16xf32>
    %cst_15 = arith.constant 0.000000e+00 : f32
    %28 = vector.broadcast %cst_15 : f32 to vector<16x16xf32>
    %29 = arith.subf %28, %27 : vector<16x16xf32>
    %30 = tpu.iota {dimensions = array<i32: 1>} : vector<16x16xi32>
    %31 = tpu.iota {dimensions = array<i32: 0>} : vector<16x16xi32>
    %cst_16 = arith.constant 0.000000e+00 : f32
    %32 = vector.broadcast %cst_16 : f32 to vector<1x16xf32>
    %c-1_i32 = arith.constant -1 : i32
    %33 = vector.broadcast %c-1_i32 : i32 to vector<1x16xi32>
    %cst_17 = arith.constant -1.000000e+30 : f32
    %c0_i32 = arith.constant 0 : i32
    %c300_i32 = arith.constant 300 : i32
    %34 = arith.addi %c0_i32, %c300_i32 : i32
    %c1_i32 = arith.constant 1 : i32
    %35:2 = scf.for %arg4 = %c0_i32 to %34 step %c1_i32 iter_args(%arg5 = %32, %arg6 = %33) -> (vector<1x16xf32>, vector<1x16xi32>)  : i32 {
      %58 = vector.broadcast %arg6 : vector<1x16xi32> to vector<16x16xi32>
      %59 = arith.cmpi eq, %58, %31 : vector<16x16xi32>
      %60 = arith.extui %59 : vector<16x16xi1> to vector<16x16xi32>
      %61 = arith.sitofp %60 : vector<16x16xi32> to vector<16x16xf32>
      %cst_28 = arith.constant dense<0xFF800000> : vector<16xf32>
      %62 = vector.multi_reduction <maximumf>, %61, %cst_28 [1] : vector<16x16xf32> to vector<16xf32>
      %63 = vector.shape_cast %62 : vector<16xf32> to vector<16x1xf32>
      %cst_29 = arith.constant 5.000000e-01 : f32
      %64 = vector.broadcast %cst_29 : f32 to vector<16x1xf32>
      %65 = arith.cmpf ogt, %63, %64 : vector<16x1xf32>
      %66 = vector.broadcast %arg5 : vector<1x16xf32> to vector<16x16xf32>
      %67 = arith.subf %29, %66 : vector<16x16xf32>
      %cst_30 = arith.constant dense<0xFF800000> : vector<16xf32>
      %68 = vector.multi_reduction <maximumf>, %67, %cst_30 [1] : vector<16x16xf32> to vector<16xf32>
      %69 = vector.shape_cast %68 : vector<16xf32> to vector<16x1xf32>
      %70 = vector.broadcast %69 : vector<16x1xf32> to vector<16x16xf32>
      %71 = arith.cmpf oge, %67, %70 : vector<16x16xf32>
      %c16_i32 = arith.constant 16 : i32
      %72 = vector.broadcast %c16_i32 : i32 to vector<16x16xi32>
      %73 = arith.select %71, %30, %72 : vector<16x16xi1>, vector<16x16xi32>
      %cst_31 = arith.constant dense<2147483647> : vector<16xi32>
      %74 = vector.multi_reduction <minsi>, %73, %cst_31 [1] : vector<16x16xi32> to vector<16xi32>
      %75 = vector.shape_cast %74 : vector<16xi32> to vector<16x1xi32>
      %76 = vector.broadcast %75 : vector<16x1xi32> to vector<16x16xi32>
      %77 = arith.cmpi eq, %30, %76 : vector<16x16xi32>
      %78 = vector.broadcast %cst_17 : f32 to vector<16x16xf32>
      %79 = arith.select %77, %78, %67 : vector<16x16xi1>, vector<16x16xf32>
      %cst_32 = arith.constant dense<0xFF800000> : vector<16xf32>
      %80 = vector.multi_reduction <maximumf>, %79, %cst_32 [1] : vector<16x16xf32> to vector<16xf32>
      %81 = vector.shape_cast %80 : vector<16xf32> to vector<16x1xf32>
      %cst_33 = arith.constant 0.000000e+00 : f32
      %82 = vector.shape_cast %arg5 : vector<1x16xf32> to vector<1x16xf32>
      %83 = vector.broadcast %82 : vector<1x16xf32> to vector<16x16xf32>
      %84 = vector.broadcast %cst_33 : f32 to vector<16x16xf32>
      %85 = arith.select %77, %83, %84 : vector<16x16xi1>, vector<16x16xf32>
      %cst_34 = arith.constant dense<0.000000e+00> : vector<16xf32>
      %86 = vector.multi_reduction <add>, %85, %cst_34 [1] : vector<16x16xf32> to vector<16xf32>
      %87 = vector.shape_cast %86 : vector<16xf32> to vector<16x1xf32>
      %88 = arith.addf %69, %87 : vector<16x1xf32>
      %89 = arith.subf %88, %81 : vector<16x1xf32>
      %cst_35 = arith.constant 1.000000e-03 : f32
      %90 = vector.broadcast %cst_35 : f32 to vector<16x1xf32>
      %91 = arith.addf %89, %90 : vector<16x1xf32>
      %92 = vector.broadcast %cst_17 : f32 to vector<16x1xf32>
      %93 = arith.select %65, %92, %91 : vector<16x1xi1>, vector<16x1xf32>
      %94 = vector.shape_cast %93 : vector<16x1xf32> to vector<16x1xf32>
      %95 = vector.broadcast %94 : vector<16x1xf32> to vector<16x16xf32>
      %96 = vector.broadcast %cst_17 : f32 to vector<16x16xf32>
      %97 = arith.select %77, %95, %96 : vector<16x16xi1>, vector<16x16xf32>
      %cst_36 = arith.constant dense<0xFF800000> : vector<16xf32>
      %98 = vector.multi_reduction <maximumf>, %97, %cst_36 [0] : vector<16x16xf32> to vector<16xf32>
      %99 = vector.shape_cast %98 : vector<16xf32> to vector<1x16xf32>
      %cst_37 = arith.constant 5.000000e-01 : f32
      %100 = arith.mulf %cst_17, %cst_37 : f32
      %101 = vector.broadcast %100 : f32 to vector<1x16xf32>
      %102 = arith.cmpf ogt, %99, %101 : vector<1x16xf32>
      %103 = vector.broadcast %99 : vector<1x16xf32> to vector<16x16xf32>
      %104 = arith.cmpf oge, %97, %103 : vector<16x16xf32>
      %cst_38 = arith.constant 5.000000e-01 : f32
      %105 = arith.mulf %cst_17, %cst_38 : f32
      %106 = vector.broadcast %105 : f32 to vector<16x16xf32>
      %107 = arith.cmpf ogt, %97, %106 : vector<16x16xf32>
      %108 = arith.andi %104, %107 : vector<16x16xi1>
      %c16_i32_39 = arith.constant 16 : i32
      %109 = vector.broadcast %c16_i32_39 : i32 to vector<16x16xi32>
      %110 = arith.select %108, %31, %109 : vector<16x16xi1>, vector<16x16xi32>
      %cst_40 = arith.constant dense<2147483647> : vector<16xi32>
      %111 = vector.multi_reduction <minsi>, %110, %cst_40 [0] : vector<16x16xi32> to vector<16xi32>
      %112 = vector.shape_cast %111 : vector<16xi32> to vector<1x16xi32>
      %113 = arith.select %102, %99, %arg5 : vector<1x16xi1>, vector<1x16xf32>
      %114 = arith.select %102, %112, %arg6 : vector<1x16xi1>, vector<1x16xi32>
      scf.yield %113, %114 : vector<1x16xf32>, vector<1x16xi32>
    }
    %36 = vector.broadcast %35#1 : vector<1x16xi32> to vector<16x16xi32>
    %37 = arith.cmpi eq, %36, %31 : vector<16x16xi32>
    %38 = arith.extui %37 : vector<16x16xi1> to vector<16x16xi32>
    %39 = arith.sitofp %38 : vector<16x16xi32> to vector<16x16xf32>
    %cst_18 = arith.constant dense<0xFF800000> : vector<16xf32>
    %40 = vector.multi_reduction <maximumf>, %39, %cst_18 [1] : vector<16x16xf32> to vector<16xf32>
    %41 = vector.shape_cast %40 : vector<16xf32> to vector<16x1xf32>
    %cst_19 = arith.constant 5.000000e-01 : f32
    %42 = vector.broadcast %cst_19 : f32 to vector<16x1xf32>
    %43 = arith.cmpf ogt, %41, %42 : vector<16x1xf32>
    %cst_20 = arith.constant 0.000000e+00 : f32
    %44 = vector.broadcast %cst_20 : f32 to vector<16x16xf32>
    %45 = arith.select %37, %27, %44 : vector<16x16xi1>, vector<16x16xf32>
    %cst_21 = arith.constant dense<0.000000e+00> : vector<16xf32>
    %46 = vector.multi_reduction <add>, %45, %cst_21 [1] : vector<16x16xf32> to vector<16xf32>
    %47 = vector.shape_cast %46 : vector<16xf32> to vector<16x1xf32>
    %cst_22 = arith.constant dense<0x7F800000> : vector<16xf32>
    %48 = vector.multi_reduction <minimumf>, %27, %cst_22 [1] : vector<16x16xf32> to vector<16xf32>
    %49 = vector.shape_cast %48 : vector<16xf32> to vector<16x1xf32>
    %50 = arith.select %43, %47, %49 : vector<16x1xi1>, vector<16x1xf32>
    %cst_23 = arith.constant dense<0.000000e+00> : vector<1xf32>
    %51 = vector.multi_reduction <add>, %50, %cst_23 [0] : vector<16x1xf32> to vector<1xf32>
    %52 = vector.shape_cast %51 : vector<1xf32> to vector<1x1xf32>
    %cst_24 = arith.constant 4.800000e+01 : f32
    %53 = vector.broadcast %cst_24 : f32 to vector<1x1xf32>
    %54 = arith.divf %52, %53 : vector<1x1xf32>
    %c0_25 = arith.constant 0 : index
    %c0_26 = arith.constant 0 : index
    %c0_27 = arith.constant 0 : index
    %55 = vector.load %arg3[%c0_25, %c0_26, %c0_27] : memref<1x1x1xf32, #tpu.memory_space<vmem>>, vector<1x1x1xf32>
    %56 = vector.shape_cast %55 : vector<1x1x1xf32> to vector<1x1xf32>
    %57 = vector.shape_cast %54 : vector<1x1xf32> to vector<1x1x1xf32>
    tpu.vector_store %arg3[%c0_25, %c0_26, %c0_27], %57 {strides = array<i32>} : memref<1x1x1xf32, #tpu.memory_space<vmem>>, vector<1x1x1xf32>,
    return
  }
  func.func @transform_0(%arg0: i32) -> (i32, i32, i32) {
    %c0_i32 = arith.constant 0 : i32
    %c0_i32_0 = arith.constant 0 : i32
    %c0_i32_1 = arith.constant 0 : i32
    return %arg0, %c0_i32, %c0_i32_0 : i32, i32, i32
  }
  func.func @transform_1(%arg0: i32) -> (i32, i32, i32) {
    %c0_i32 = arith.constant 0 : i32
    %c0_i32_0 = arith.constant 0 : i32
    %c0_i32_1 = arith.constant 0 : i32
    return %arg0, %c0_i32, %c0_i32_0 : i32, i32, i32
  }
  func.func @transform_2(%arg0: i32) -> (i32, i32, i32) {
    %c0_i32 = arith.constant 0 : i32
    %c0_i32_0 = arith.constant 0 : i32
    %c0_i32_1 = arith.constant 0 : i32
    return %arg0, %c0_i32, %c0_i32_0 : i32, i32, i32
  }
}

</mosaic_0001>

<llo_original>
// kernel: loss_fn.2
$region0: #{loss_fn.2}
  #allocation0 [shape = 'u32[]', space=smem, size = 0x4, offset = 0x4, fixed_abs, tag = 'smem constant byte address 0x4 - core index']
  #allocation1 [shape = 'u32[144,128]{1,0:T(1,128)}', space=vmem, size = 0x12000, scoped, tag = 'internal scratch']
  %s0 = inlined_call_operand.vmem [shape: f32[2,16,3], index: 0, kind: input, shape index: {}]
  %s1 = inlined_call_operand.vmem [shape: f32[2,3,16], index: 1, kind: input, shape index: {}]
  %s2 = inlined_call_operand.vmem [shape: f32[2,1,1], index: 2, kind: output, shape index: {}]
  %s3 = sld [smem:[#allocation0]]
  $region48: #{loss_fn.2} parent=0
    _
  %s5 = ssub.s32 1, %s3
  %s6 = scalar_select 0, %s5, %s3
  loop: start=0, step=1, limit=4
  $region2: #{loss_fn.2} parent=0 // loop_pre_header
    _
  $region3: #{loss_fn.2} parent=0 // loop_header
    %s8 = sphi 0, %s12
    %p9 = scmp.ge.s32.totalorder %s8, 4
    %s18 = sphi 0, %s20
    %s21 = sphi 0, %s18
    %s22 = sphi 0, %s21
    %s38 = sphi 0, %s22
    %s44 = sphi 0, %s46
    %s47 = sphi 0, %s44
    %s48 = sphi 0, %s47
    %s64 = sphi 0, %s48
    %s70 = sphi 0, %s72
    %s73 = sphi 0, %s70
    %s74 = sphi 0, %s73
    %s90 = sphi 0, %s74
  $region4: #{loss_fn.2} parent=0 // loop_header_branch
    %11 = sbr.rel (%p9) target = $region8
  $region5: #{loss_fn.2} parent=0 // loop_body
    %s13 = ssub.s32 %s8, 1
    %s14 = ssub.s32 %s8, 2
    %s15 = sadd.s32 %s8, 1
    %s16 = ssub.s32 %s8, %s15
    %p17 = scmp.eq.s32.totalorder %s16, 0
    %s19 = sadd.s32 %s18, 1
    %s20 = scalar_select %p17, %s18, %s19
    %p23 = pneg %p17
    %p24 = scmp.eq.s32.totalorder %s8, 1
    %p25 = por %p23, %p24
    %p26 = scmp.ne.s32.totalorder %s18, %s21
    %p27 = scmp.eq.s32.totalorder %s8, 0
    %p28 = por %p26, %p27
    %p29 = scmp.ne.s32.totalorder %s18, %s21
    %p30 = scmp.eq.s32.totalorder %s13, 1
    %p31 = por %p29, %p30
    %p32 = scmp.ne.s32.totalorder %s21, %s22
    %p33 = scmp.eq.s32.totalorder %s13, 0
    %p34 = por %p32, %p33
    %p35 = scmp.ne.s32.totalorder %s21, %s22
    %p36 = scmp.eq.s32.totalorder %s14, 1
    %p37 = por %p35, %p36
    %p39 = scmp.ne.s32.totalorder %s22, %s38
    %p40 = scmp.eq.s32.totalorder %s14, 0
    %p41 = por %p39, %p40
    %s42 = ssub.s32 %s8, %s15
    %p43 = scmp.eq.s32.totalorder %s42, 0
    %s45 = sadd.s32 %s44, 1
    %s46 = scalar_select %p43, %s44, %s45
    %p49 = pneg %p43
    %p50 = scmp.eq.s32.totalorder %s8, 1
    %p51 = por %p49, %p50
    %p52 = scmp.ne.s32.totalorder %s44, %s47
    %p53 = scmp.eq.s32.totalorder %s8, 0
    %p54 = por %p52, %p53
    %p55 = scmp.ne.s32.totalorder %s44, %s47
    %p56 = scmp.eq.s32.totalorder %s13, 1
    %p57 = por %p55, %p56
    %p58 = scmp.ne.s32.totalorder %s47, %s48
    %p59 = scmp.eq.s32.totalorder %s13, 0
    %p60 = por %p58, %p59
    %p61 = scmp.ne.s32.totalorder %s47, %s48
    %p62 = scmp.eq.s32.totalorder %s14, 1
    %p63 = por %p61, %p62
    %p65 = scmp.ne.s32.totalorder %s48, %s64
    %p66 = scmp.eq.s32.totalorder %s14, 0
    %p67 = por %p65, %p66
    %s68 = ssub.s32 %s8, %s15
    %p69 = scmp.eq.s32.totalorder %s68, 0
    %s71 = sadd.s32 %s70, 1
    %s72 = scalar_select %p69, %s70, %s71
    %p75 = pneg %p69
    %p76 = scmp.eq.s32.totalorder %s8, 1
    %p77 = por %p75, %p76
    %p78 = scmp.ne.s32.totalorder %s70, %s73
    %p79 = scmp.eq.s32.totalorder %s8, 0
    %p80 = por %p78, %p79
    %p81 = scmp.ne.s32.totalorder %s70, %s73
    %p82 = scmp.eq.s32.totalorder %s13, 1
    %p83 = por %p81, %p82
    %p84 = scmp.ne.s32.totalorder %s73, %s74
    %p85 = scmp.eq.s32.totalorder %s13, 0
    %p86 = por %p84, %p85
    %p87 = scmp.ne.s32.totalorder %s73, %s74
    %p88 = scmp.eq.s32.totalorder %s14, 1
    %p89 = por %p87, %p88
    %p91 = scmp.ne.s32.totalorder %s74, %s90
    %p92 = scmp.eq.s32.totalorder %s14, 0
    %p93 = por %p91, %p92
    %p94 = scmp.le.s32.totalorder 1, %s8
    %p95 = scmp.lt.s32.totalorder %s8, 3
    %p96 = pnand %p94, %p95
    %p97 = pneg %p96
    // Predicated region
    $region9: #{loss_fn.2} parent=5 // pred_check
      _
    $region10: #{loss_fn.2} parent=5 // pred_check_branch
      %99 = sbr.rel (%p96) target = $region12
    $region11: #{loss_fn.2} parent=5 // pred_region
      %s100 = ssub.s32 %s8, 1
    $region12: #{loss_fn.2} parent=5 // pred_fallthru
      _
    %p101 = scmp.lt.s32.totalorder %s8, 2
    // Predicated region
    $region13: #{loss_fn.2} parent=5 // pred_check
      %p102 = pneg %p101
    $region14: #{loss_fn.2} parent=5 // pred_check_branch
      %104 = sbr.rel (%p102) target = $region16
    $region15: #{loss_fn.2} parent=5 // pred_region
      // Predicated region
      $region17: #{loss_fn.2} parent=15 // pred_check
        %p105 = pneg %p28
      $region18: #{loss_fn.2} parent=15 // pred_check_branch
        %107 = sbr.rel (%p105) target = $region20
      $region19: #{loss_fn.2} parent=15 // pred_region
        %p108 = scmp.lt.s32.totalorder %s8, 1
        %s109 = scalar_select %p108, %s8, 1
        %s110 = smul.addr %s109, 2
        %s111 = smul.addr %s110, 8
        %s112 = scalar_lea.vmem %s0, %s111
      $region20: #{loss_fn.2} parent=15 // pred_fallthru
        _
      // Predicated region
      $region21: #{loss_fn.2} parent=15 // pred_check
        %p113 = pneg %p54
      $region22: #{loss_fn.2} parent=15 // pred_check_branch
        %115 = sbr.rel (%p113) target = $region24
      $region23: #{loss_fn.2} parent=15 // pred_region
        %p116 = scmp.lt.s32.totalorder %s8, 1
        %s117 = scalar_select %p116, %s8, 1
        %s118 = smul.addr %s117, 4
        %s119 = scalar_lea.vmem %s1, %s118
      $region24: #{loss_fn.2} parent=15 // pred_fallthru
        _
    $region16: #{loss_fn.2} parent=5 // pred_fallthru
      _
    %p120 = scmp.le.s32.totalorder 1, %s8
    %p121 = scmp.lt.s32.totalorder %s8, 3
    %p122 = pnand %p120, %p121
    %p123 = pneg %p122
    // Predicated region
    $region25: #{loss_fn.2} parent=5 // pred_check
      _
    $region26: #{loss_fn.2} parent=5 // pred_check_branch
      %125 = sbr.rel (%p122) target = $region28
    $region27: #{loss_fn.2} parent=5 // pred_region
      %s126 = ssub.s32 %s8, 1
      %p127 = scmp.lt.s32.totalorder %s13, 1
      %s128 = scalar_select %p127, %s13, 1
      %s129 = smul.addr %s128, 2
      %s130 = smul.addr %s129, 8
      %s131 = scalar_lea.vmem %s0, %s130
      %p132 = pneg %p34
      %p133 = pneg %p31
      %p134 = scmp.lt.s32.totalorder %s13, 1
      %s135 = scalar_select %p134, %s13, 1
      %s136 = smul.addr %s135, 4
      %s137 = scalar_lea.vmem %s1, %s136
      %p138 = pneg %p60
      %p139 = pneg %p57
      %p140 = pneg %p86
      %p141 = pneg %p83
      %p142 = scmp.lt.s32.totalorder %s13, 1
      %s143 = scalar_select %p142, %s13, 1
      %s144 = scalar_lea.vmem %s2, %s143
      %p145 = scmp.lt.s32.totalorder %s13, 1
      %s146 = scalar_select %p145, %s13, 1
      %s147 = smul.addr %s146, 2
      %s148 = smul.addr %s147, 8
      %s149 = scalar_lea.vmem %s0, %s148
      %p150 = scmp.lt.s32.totalorder %s13, 1
      %s151 = scalar_select %p150, %s13, 1
      %s152 = smul.addr %s151, 4
      %s153 = scalar_lea.vmem %s1, %s152
      %p154 = scmp.lt.s32.totalorder %s13, 1
      %s155 = scalar_select %p154, %s13, 1
      %s156 = scalar_lea.vmem %s2, %s155
      %v157 = vld [vmem:[%s149] sm:$0xff]
      %v158 = vld [vmem:[%s149 + $0x8] sm:$0xff]
      %v159 = vld [vmem:[%s153] sm:$0x1]
      %161 = vset.pattern.permute.xlu0 0
      %162 = vperm.xlu0 %161, %v157
      %v163 = vpop.permute.xlu0 %162
      %166 = vset.pattern.permute.xlu0 0
      %167 = vperm.xlu0 %166, %v158
      %v168 = vpop.permute.xlu0 %167
      %v170 = vlaneseq
      %v171 = vshrl.u32 %v170, 7
      %v172 = vsub.s32 0, %v171
      %v173 = vrot.slane %v159, %v172
      %v174 = vsub.f32 %v163, %v173
      %v175 = vsub.f32 %v168, %v173
      %v176 = vmul.f32 %v174, %v174
      %v177 = vmul.f32 %v175, %v175
      %v178 = vadd.f32 %v176, 0.0
      %v179 = vadd.f32 %v177, 0.0
      %v180 = vld [vmem:[%s153 + $0x1] sm:$0x1]
      %181 = vset.pattern.permute.xlu0 1
      %182 = vperm.xlu0 %181, %v157
      %v183 = vpop.permute.xlu0 %182
      %185 = vset.pattern.permute.xlu0 1
      %186 = vperm.xlu0 %185, %v158
      %v187 = vpop.permute.xlu0 %186
      %v189 = vlaneseq
      %v190 = vshrl.u32 %v189, 7
      %v191 = vsub.s32 0, %v190
      %v192 = vrot.slane %v180, %v191
      %v193 = vsub.f32 %v183, %v192
      %v194 = vsub.f32 %v187, %v192
      %v195 = vmul.f32 %v193, %v193
      %v196 = vmul.f32 %v194, %v194
      %v197 = vadd.f32 %v178, %v195
      %v198 = vadd.f32 %v179, %v196
      %v199 = vld [vmem:[%s153 + $0x2] sm:$0x1]
      %200 = vset.pattern.permute.xlu0 2
      %201 = vperm.xlu0 %200, %v157
      %v202 = vpop.permute.xlu0 %201
      %204 = vset.pattern.permute.xlu0 2
      %205 = vperm.xlu0 %204, %v158
      %v206 = vpop.permute.xlu0 %205
      %v208 = vlaneseq
      %v209 = vshrl.u32 %v208, 7
      %v210 = vsub.s32 0, %v209
      %v211 = vrot.slane %v199, %v210
      %v212 = vsub.f32 %v202, %v211
      %v213 = vsub.f32 %v206, %v211
      %v214 = vmul.f32 %v212, %v212
      %v215 = vmul.f32 %v213, %v213
      %v216 = vadd.f32 %v197, %v214
      %v217 = vadd.f32 %v198, %v215
      %v218 = vsub.f32 0.0, %v216
      %v219 = vsub.f32 0.0, %v217
      %v220 = vlaneseq
      %v221 = vand.u32 %v220, 127
      %v222 = vlaneseq
      %v223 = vshrl.u32 %v222, 7
      %v224 = vadd.s32 %v223, 8
      loop: start=0, step=1, limit=300
      $region29: #{loss_fn.2} parent=27 // loop_pre_header
        _
      $region30: #{loss_fn.2} parent=27 // loop_header
        %s226 = sphi 0, %s230
        %p227 = scmp.ge.s32.totalorder %s226, 300
        %v231 = vphi 0.0, %v349
        %v232 = vphi 4294967295, %v350
      $region31: #{loss_fn.2} parent=27 // loop_header_branch
        %229 = sbr.rel (%p227) target = $region35
      $region32: #{loss_fn.2} parent=27 // loop_body
        %vm233 = vcmp.eq.s32.totalorder %v232, %v223
        %vm234 = vcmp.eq.s32.totalorder %v232, %v224
        %v235 = vsel %vm233, 1, 0
        %v236 = vsel %vm234, 1, 0
        %v237 = vcvt.s32.f32 %v235
        %v238 = vcvt.s32.f32 %v236
        %vm239 = vcmask 130048
        %v240 = vsel %vm239, %v237, -inf
        %241 = vmax.xlane.f32.xlu0 %v240
        %v242 = vpop.xlane.xlu0 %241
        %v243 = vsel %vm239, %v238, -inf
        %244 = vmax.xlane.f32.xlu0 %v243
        %v245 = vpop.xlane.xlu0 %244
        %vm246 = vcmp.gt.f32.partialorder %v242, 0.5
        %vm247 = vcmp.gt.f32.partialorder %v245, 0.5
        %v248 = vsub.f32 %v218, %v231
        %v249 = vsub.f32 %v219, %v231
        %v250 = vsel %vm239, %v248, -inf
        %251 = vmax.xlane.f32.xlu0 %v250
        %v252 = vpop.xlane.xlu0 %251
        %v253 = vsel %vm239, %v249, -inf
        %254 = vmax.xlane.f32.xlu0 %v253
        %v255 = vpop.xlane.xlu0 %254
        %vm256 = vcmp.ge.f32.partialorder %v248, %v252
        %vm257 = vcmp.ge.f32.partialorder %v249, %v255
        %v258 = vsel %vm256, %v221, 16
        %v259 = vsel %vm257, %v221, 16
        %v260 = vsel %vm239, %v258, 2147483647
        %v261 = vand.u32 %v260, 65535
        %v262 = vshra.s32 %v260, 16
        %v263 = vcvt.s32.f32 %v261
        %v264 = vcvt.s32.f32 %v262
        %265 = vmin.xlane.f32.xlu0 %v264
        %v266 = vpop.xlane.xlu0 %265
        %vm267 = vcmp.eq.f32.partialorder %v264, %v266
        %v268 = vsel %vm267, %v263, inf
        %269 = vmin.xlane.f32.xlu0 %v268
        %v270 = vpop.xlane.xlu0 %269
        %v271 = vcvt.f32.s32 %v270
        %v272 = vcvt.f32.s32 %v266
        %v273 = vshll.u32 %v272, 16
        %v274 = vadd.s32 %v273, %v271
        %v275 = vsel %vm239, %v259, 2147483647
        %v276 = vand.u32 %v275, 65535
        %v277 = vshra.s32 %v275, 16
        %v278 = vcvt.s32.f32 %v276
        %v279 = vcvt.s32.f32 %v277
        %280 = vmin.xlane.f32.xlu0 %v279
        %v281 = vpop.xlane.xlu0 %280
        %vm282 = vcmp.eq.f32.partialorder %v279, %v281
        %v283 = vsel %vm282, %v278, inf
        %284 = vmin.xlane.f32.xlu0 %v283
        %v285 = vpop.xlane.xlu0 %284
        %v286 = vcvt.f32.s32 %v285
        %v287 = vcvt.f32.s32 %v281
        %v288 = vshll.u32 %v287, 16
        %v289 = vadd.s32 %v288, %v286
        %vm290 = vcmp.eq.s32.totalorder %v221, %v274
        %vm291 = vcmp.eq.s32.totalorder %v221, %v289
        %v292 = vsel %vm290, -1e+30, %v248
        %v293 = vsel %vm291, -1e+30, %v249
        %v294 = vsel %vm239, %v292, -inf
        %295 = vmax.xlane.f32.xlu0 %v294
        %v296 = vpop.xlane.xlu0 %295
        %v297 = vsel %vm239, %v293, -inf
        %298 = vmax.xlane.f32.xlu0 %v297
        %v299 = vpop.xlane.xlu0 %298
        %v300 = vsel %vm290, %v231, 0.0
        %v301 = vsel %vm291, %v231, 0.0
        %v302 = vsel %vm239, %v300, 0.0
        %303 = vadd.xlane.f32.xlu0 %v302
        %v304 = vpop.xlane.xlu0 %303
        %v305 = vsel %vm239, %v301, 0.0
        %306 = vadd.xlane.f32.xlu0 %v305
        %v307 = vpop.xlane.xlu0 %306
        %v308 = vadd.f32 %v252, %v304
        %v309 = vadd.f32 %v255, %v307
        %v310 = vsub.f32 %v308, %v296
        %v311 = vsub.f32 %v309, %v299
        %v312 = vadd.f32 %v310, 0.001
        %v313 = vadd.f32 %v311, 0.001
        %v314 = vsel %vm246, -1e+30, %v312
        %v315 = vsel %vm247, -1e+30, %v313
        %v316 = vsel %vm290, %v314, -1e+30
        %v317 = vsel %vm291, %v315, -1e+30
        %v318 = vsel %vm239, %v316, -inf
        %v319 = vsel %vm239, %v317, -inf
        %v320 = vmax.f32 %v318, %v319
        %v321 = vrot.slane %v320, 4
        %v322 = vmax.f32 %v320, %v321
        %v323 = vrot.slane %v322, 2
        %v324 = vmax.f32 %v322, %v323
        %v325 = vrot.slane %v324, 1
        %v326 = vmax.f32 %v324, %v325
        %vm327 = vcmp.gt.f32.partialorder %v326, -5e+29
        %vm328 = vcmp.ge.f32.partialorder %v316, %v326
        %vm329 = vcmp.ge.f32.partialorder %v317, %v326
        %vm330 = vcmp.gt.f32.partialorder %v316, -5e+29
        %vm331 = vcmp.gt.f32.partialorder %v317, -5e+29
        %vm332 = vmand %vm328, %vm330
        %vm333 = vmand %vm329, %vm331
        %v334 = vsel %vm332, %v223, 16
        %v335 = vsel %vm333, %v224, 16
        %v336 = vsel %vm239, %v334, 2147483647
        %v337 = vsel %vm239, %v335, 2147483647
        %vm338 = vcmp.lt.s32.totalorder %v336, %v337
        %v339 = vsel %vm338, %v336, %v337
        %v340 = vrot.slane %v339, 4
        %vm341 = vcmp.lt.s32.totalorder %v339, %v340
        %v342 = vsel %vm341, %v339, %v340
        %v343 = vrot.slane %v342, 2
        %vm344 = vcmp.lt.s32.totalorder %v342, %v343
        %v345 = vsel %vm344, %v342, %v343
        %v346 = vrot.slane %v345, 1
        %vm347 = vcmp.lt.s32.totalorder %v345, %v346
        %v348 = vsel %vm347, %v345, %v346
        %v349 = vsel %vm327, %v326, %v231
        %v350 = vsel %vm327, %v348, %v232
      $region33: #{loss_fn.2} parent=27 // loop_footer
        %s230 = sadd.s32 1, %s226
      $region34: #{loss_fn.2} parent=27 // loop_footer_branch
        %225 = sbr.rel target = $region30
      $region35: #{loss_fn.2} parent=27 // loop_exit
        _
      %vm351 = vcmp.eq.s32.totalorder %v232, %v223
      %vm352 = vcmp.eq.s32.totalorder %v232, %v224
      %v353 = vsel %vm351, 1, 0
      %v354 = vsel %vm352, 1, 0
      %v355 = vcvt.s32.f32 %v353
      %v356 = vcvt.s32.f32 %v354
      %vm357 = vcmask 130048
      %v358 = vsel %vm357, %v355, -inf
      %359 = vmax.xlane.f32.xlu0 %v358
      %v360 = vpop.xlane.xlu0 %359
      %v361 = vsel %vm357, %v356, -inf
      %362 = vmax.xlane.f32.xlu0 %v361
      %v363 = vpop.xlane.xlu0 %362
      %vm364 = vcmp.gt.f32.partialorder %v360, 0.5
      %vm365 = vcmp.gt.f32.partialorder %v363, 0.5
      %v366 = vsel %vm351, %v216, 0.0
      %v367 = vsel %vm352, %v217, 0.0
      %v368 = vsel %vm357, %v366, 0.0
      %369 = vadd.xlane.f32.xlu0 %v368
      %v370 = vpop.xlane.xlu0 %369
      %v371 = vsel %vm357, %v367, 0.0
      %372 = vadd.xlane.f32.xlu0 %v371
      %v373 = vpop.xlane.xlu0 %372
      %v374 = vsel %vm357, %v216, inf
      %375 = vmin.xlane.f32.xlu0 %v374
      %v376 = vpop.xlane.xlu0 %375
      %v377 = vsel %vm357, %v217, inf
      %378 = vmin.xlane.f32.xlu0 %v377
      %v379 = vpop.xlane.xlu0 %378
      %v380 = vsel %vm364, %v370, %v376
      %v381 = vsel %vm365, %v373, %v379
      %v382 = vadd.f32 %v380, %v381
      %v383 = vrot.slane %v382, 4
      %v384 = vadd.f32 %v382, %v383
      %v385 = vrot.slane %v384, 2
      %v386 = vadd.f32 %v384, %v385
      %v387 = vrot.slane %v386, 1
      %v388 = vadd.f32 %v386, %v387
      %v389 = vrcp.pop 48.0
      %v390 = vmul.f32 %v388, %v389
      %vm391 = vcmask 0
      %392 = vst.msk [vmem:[%s156] sm:$0x1] %vm391, %v390
      %p393 = scmp.lt.s32.totalorder %s13, 1
      %s394 = scalar_select %p393, %s13, 1
      %s395 = scalar_lea.vmem %s2, %s394
      // Predicated region
      $region36: #{loss_fn.2} parent=27 // pred_check
        %p396 = pneg %p83
      $region37: #{loss_fn.2} parent=27 // pred_check_branch
        %398 = sbr.rel (%p396) target = $region39
      $region38: #{loss_fn.2} parent=27 // pred_region
        _
      $region39: #{loss_fn.2} parent=27 // pred_fallthru
        _
    $region28: #{loss_fn.2} parent=5 // pred_fallthru
      _
    %p399 = scmp.le.s32.totalorder 2, %s8
    // Predicated region
    $region40: #{loss_fn.2} parent=5 // pred_check
      %p400 = pneg %p399
    $region41: #{loss_fn.2} parent=5 // pred_check_branch
      %402 = sbr.rel (%p400) target = $region43
    $region42: #{loss_fn.2} parent=5 // pred_region
      %s403 = ssub.s32 %s8, 2
      // Predicated region
      $region44: #{loss_fn.2} parent=42 // pred_check
        %p404 = pneg %p89
      $region45: #{loss_fn.2} parent=42 // pred_check_branch
        %406 = sbr.rel (%p404) target = $region47
      $region46: #{loss_fn.2} parent=42 // pred_region
        %p407 = scmp.lt.s32.totalorder %s14, 1
        %s408 = scalar_select %p407, %s14, 1
        %s409 = scalar_lea.vmem %s2, %s408
      $region47: #{loss_fn.2} parent=42 // pred_fallthru
        _
    $region43: #{loss_fn.2} parent=5 // pred_fallthru
      _
  $region6: #{loss_fn.2} parent=0 // loop_footer
    %s12 = sadd.s32 1, %s8
  $region7: #{loss_fn.2} parent=0 // loop_footer_branch
    %7 = sbr.rel target = $region3
  $region8: #{loss_fn.2} parent=0 // loop_exit
    _

// kernel: loss_fn.3
$region0: #{loss_fn.3}
  #allocation0 [shape = 'u32[]', space=smem, size = 0x4, offset = 0x4, fixed_abs, tag = 'smem constant byte address 0x4 - core index']
  #allocation1 [shape = 'u32[144,128]{1,0:T(1,128)}', space=vmem, size = 0x12000, scoped, tag = 'internal scratch']
  #allocation2 [shape = 'f32[16,10]{1,0:T(8,128)}', space=vmem, size = 0x2000, scoped, tag = 'scratch operand']
  %s0 = inlined_call_operand.vmem [shape: f32[2,16,3], index: 0, kind: input, shape index: {}]
  %s1 = inlined_call_operand.vmem [shape: f32[2,3,16], index: 1, kind: input, shape index: {}]
  %s2 = inlined_call_operand.vmem [shape: f32[2,16,10], index: 2, kind: output, shape index: {}]
  %s3 = sld [smem:[#allocation0]]
  $region49: #{loss_fn.3} parent=0
    _
  %s5 = ssub.s32 1, %s3
  %s6 = scalar_select 0, %s5, %s3
  loop: start=0, step=1, limit=4
  $region2: #{loss_fn.3} parent=0 // loop_pre_header
    _
  $region3: #{loss_fn.3} parent=0 // loop_header
    %s8 = sphi 0, %s12
    %p9 = scmp.ge.s32.totalorder %s8, 4
    %s15 = sphi 0, %s34
    %s16 = sphi 0, %s30
    %s17 = sphi 0, %s26
    %s18 = sphi 0, %s15
    %s19 = sphi 0, %s16
    %s20 = sphi 0, %s17
    %s21 = sphi 0, %s18
    %s22 = sphi 0, %s19
    %s23 = sphi 0, %s20
    %s39 = sphi 0, %s41
    %s42 = sphi 0, %s39
    %s43 = sphi 0, %s42
    %s59 = sphi 0, %s43
    %s67 = sphi 0, %s69
    %s70 = sphi 0, %s67
    %s71 = sphi 0, %s70
    %s87 = sphi 0, %s71
    %s95 = sphi 0, %s97
    %s98 = sphi 0, %s95
    %s99 = sphi 0, %s98
    %s115 = sphi 0, %s99
  $region4: #{loss_fn.3} parent=0 // loop_header_branch
    %11 = sbr.rel (%p9) target = $region8
  $region5: #{loss_fn.3} parent=0 // loop_body
    %s13 = ssub.s32 %s8, 1
    %s14 = ssub.s32 %s8, 2
    %s24 = sadd.s32 1, %s17
    %p25 = scmp.ge.s32.totalorder %s24, 1
    %s26 = scalar_select %p25, 0, %s24
    %s27 = sadd.s32 1, %s16
    %s28 = scalar_select %p25, %s27, %s16
    %p29 = scmp.ge.s32.totalorder %s28, 1
    %s30 = scalar_select %p29, 0, %s28
    %s31 = sadd.s32 1, %s15
    %s32 = scalar_select %p29, %s31, %s15
    %p33 = scmp.ge.s32.totalorder %s32, 2
    %s34 = scalar_select %p33, 0, %s32
    %s35 = ssub.s32 %s15, %s34
    %s36 = ssub.s32 %s16, %s30
    %s37 = sor.u32 %s35, %s36
    %p38 = scmp.eq.s32.totalorder %s37, 0
    %s40 = sadd.s32 %s39, 1
    %s41 = scalar_select %p38, %s39, %s40
    %p44 = pneg %p38
    %p45 = scmp.eq.s32.totalorder %s8, 1
    %p46 = por %p44, %p45
    %p47 = scmp.ne.s32.totalorder %s39, %s42
    %p48 = scmp.eq.s32.totalorder %s8, 0
    %p49 = por %p47, %p48
    %p50 = scmp.ne.s32.totalorder %s39, %s42
    %p51 = scmp.eq.s32.totalorder %s13, 1
    %p52 = por %p50, %p51
    %p53 = scmp.ne.s32.totalorder %s42, %s43
    %p54 = scmp.eq.s32.totalorder %s13, 0
    %p55 = por %p53, %p54
    %p56 = scmp.ne.s32.totalorder %s42, %s43
    %p57 = scmp.eq.s32.totalorder %s14, 1
    %p58 = por %p56, %p57
    %p60 = scmp.ne.s32.totalorder %s43, %s59
    %p61 = scmp.eq.s32.totalorder %s14, 0
    %p62 = por %p60, %p61
    %s63 = ssub.s32 %s15, %s34
    %s64 = ssub.s32 %s17, %s26
    %s65 = sor.u32 %s63, %s64
    %p66 = scmp.eq.s32.totalorder %s65, 0
    %s68 = sadd.s32 %s67, 1
    %s69 = scalar_select %p66, %s67, %s68
    %p72 = pneg %p66
    %p73 = scmp.eq.s32.totalorder %s8, 1
    %p74 = por %p72, %p73
    %p75 = scmp.ne.s32.totalorder %s67, %s70
    %p76 = scmp.eq.s32.totalorder %s8, 0
    %p77 = por %p75, %p76
    %p78 = scmp.ne.s32.totalorder %s67, %s70
    %p79 = scmp.eq.s32.totalorder %s13, 1
    %p80 = por %p78, %p79
    %p81 = scmp.ne.s32.totalorder %s70, %s71
    %p82 = scmp.eq.s32.totalorder %s13, 0
    %p83 = por %p81, %p82
    %p84 = scmp.ne.s32.totalorder %s70, %s71
    %p85 = scmp.eq.s32.totalorder %s14, 1
    %p86 = por %p84, %p85
    %p88 = scmp.ne.s32.totalorder %s71, %s87
    %p89 = scmp.eq.s32.totalorder %s14, 0
    %p90 = por %p88, %p89
    %s91 = ssub.s32 %s15, %s34
    %s92 = ssub.s32 %s16, %s30
    %s93 = sor.u32 %s91, %s92
    %p94 = scmp.eq.s32.totalorder %s93, 0
    %s96 = sadd.s32 %s95, 1
    %s97 = scalar_select %p94, %s95, %s96
    %p100 = pneg %p94
    %p101 = scmp.eq.s32.totalorder %s8, 1
    %p102 = por %p100, %p101
    %p103 = scmp.ne.s32.totalorder %s95, %s98
    %p104 = scmp.eq.s32.totalorder %s8, 0
    %p105 = por %p103, %p104
    %p106 = scmp.ne.s32.totalorder %s95, %s98
    %p107 = scmp.eq.s32.totalorder %s13, 1
    %p108 = por %p106, %p107
    %p109 = scmp.ne.s32.totalorder %s98, %s99
    %p110 = scmp.eq.s32.totalorder %s13, 0
    %p111 = por %p109, %p110
    %p112 = scmp.ne.s32.totalorder %s98, %s99
    %p113 = scmp.eq.s32.totalorder %s14, 1
    %p114 = por %p112, %p113
    %p116 = scmp.ne.s32.totalorder %s99, %s115
    %p117 = scmp.eq.s32.totalorder %s14, 0
    %p118 = por %p116, %p117
    %p119 = scmp.le.s32.totalorder 1, %s8
    %p120 = scmp.lt.s32.totalorder %s8, 3
    %p121 = pnand %p119, %p120
    %p122 = pneg %p121
    // Predicated region
    $region9: #{loss_fn.3} parent=5 // pred_check
      _
    $region10: #{loss_fn.3} parent=5 // pred_check_branch
      %124 = sbr.rel (%p121) target = $region12
    $region11: #{loss_fn.3} parent=5 // pred_region
      %s125 = ssub.s32 %s8, 1
    $region12: #{loss_fn.3} parent=5 // pred_fallthru
      _
    %p126 = scmp.lt.s32.totalorder %s8, 2
    // Predicated region
    $region13: #{loss_fn.3} parent=5 // pred_check
      %p127 = pneg %p126
    $region14: #{loss_fn.3} parent=5 // pred_check_branch
      %129 = sbr.rel (%p127) target = $region16
    $region15: #{loss_fn.3} parent=5 // pred_region
      // Predicated region
      $region17: #{loss_fn.3} parent=15 // pred_check
        %p130 = pneg %p49
      $region18: #{loss_fn.3} parent=15 // pred_check_branch
        %132 = sbr.rel (%p130) target = $region20
      $region19: #{loss_fn.3} parent=15 // pred_region
        %s133 = smul.u32 2, %s16
        %p134 = scmp.lt.s32.totalorder %s15, 1
        %s135 = scalar_select %p134, %s15, 1
        %p136 = scmp.lt.s32.totalorder %s133, 1
        %s137 = scalar_select %p136, %s133, 1
        %s138 = smul.addr %s135, 2
        %s139 = sadd.s32 %s137, %s138
        %s140 = smul.addr %s139, 8
        %s141 = scalar_lea.vmem %s0, %s140
        %s142 = smul.u32 2, %s16
      $region20: #{loss_fn.3} parent=15 // pred_fallthru
        _
      // Predicated region
      $region21: #{loss_fn.3} parent=15 // pred_check
        %p143 = pneg %p77
      $region22: #{loss_fn.3} parent=15 // pred_check_branch
        %145 = sbr.rel (%p143) target = $region24
      $region23: #{loss_fn.3} parent=15 // pred_region
        %p146 = scmp.lt.s32.totalorder %s15, 1
        %s147 = scalar_select %p146, %s15, 1
        %p148 = scmp.lt.s32.totalorder %s17, 0
        %s149 = scalar_select %p148, %s17, 0
        %s150 = sadd.s32 %s149, %s147
        %s151 = smul.addr %s150, 4
        %s152 = scalar_lea.vmem %s1, %s151
      $region24: #{loss_fn.3} parent=15 // pred_fallthru
        _
    $region16: #{loss_fn.3} parent=5 // pred_fallthru
      _
    %p153 = scmp.le.s32.totalorder 1, %s8
    %p154 = scmp.lt.s32.totalorder %s8, 3
    %p155 = pnand %p153, %p154
    %p156 = pneg %p155
    // Predicated region
    $region25: #{loss_fn.3} parent=5 // pred_check
      _
    $region26: #{loss_fn.3} parent=5 // pred_check_branch
      %158 = sbr.rel (%p155) target = $region28
    $region27: #{loss_fn.3} parent=5 // pred_region
      %s159 = ssub.s32 %s8, 1
      %s160 = smul.u32 2, %s19
      %p161 = scmp.lt.s32.totalorder %s18, 1
      %s162 = scalar_select %p161, %s18, 1
      %p163 = scmp.lt.s32.totalorder %s160, 1
      %s164 = scalar_select %p163, %s160, 1
      %s165 = smul.addr %s162, 2
      %s166 = sadd.s32 %s164, %s165
      %s167 = smul.addr %s166, 8
      %s168 = scalar_lea.vmem %s0, %s167
      %p169 = pneg %p55
      %p170 = pneg %p52
      %p171 = scmp.lt.s32.totalorder %s18, 1
      %s172 = scalar_select %p171, %s18, 1
      %p173 = scmp.lt.s32.totalorder %s20, 0
      %s174 = scalar_select %p173, %s20, 0
      %s175 = sadd.s32 %s174, %s172
      %s176 = smul.addr %s175, 4
      %s177 = scalar_lea.vmem %s1, %s176
      %p178 = pneg %p83
      %p179 = pneg %p80
      %p180 = pneg %p111
      %p181 = pneg %p108
      %s182 = smul.u32 2, %s19
      %p183 = scmp.lt.s32.totalorder %s18, 1
      %s184 = scalar_select %p183, %s18, 1
      %p185 = scmp.lt.s32.totalorder %s182, 1
      %s186 = scalar_select %p185, %s182, 1
      %s187 = smul.addr %s184, 2
      %s188 = sadd.s32 %s186, %s187
      %s189 = smul.addr %s188, 8
      %s190 = scalar_lea.vmem %s2, %s189
      %s191 = smul.u32 2, %s19
      %p192 = scmp.lt.s32.totalorder %s18, 1
      %s193 = scalar_select %p192, %s18, 1
      %p194 = scmp.lt.s32.totalorder %s191, 1
      %s195 = scalar_select %p194, %s191, 1
      %s196 = smul.addr %s193, 2
      %s197 = sadd.s32 %s195, %s196
      %s198 = smul.addr %s197, 8
      %s199 = scalar_lea.vmem %s0, %s198
      %s200 = smul.u32 2, %s19
      %p201 = scmp.lt.s32.totalorder %s18, 1
      %s202 = scalar_select %p201, %s18, 1
      %p203 = scmp.lt.s32.totalorder %s20, 0
      %s204 = scalar_select %p203, %s20, 0
      %s205 = sadd.s32 %s204, %s202
      %s206 = smul.addr %s205, 4
      %s207 = scalar_lea.vmem %s1, %s206
      %s208 = smul.u32 2, %s19
      %p209 = scmp.lt.s32.totalorder %s18, 1
      %s210 = scalar_select %p209, %s18, 1
      %p211 = scmp.lt.s32.totalorder %s208, 1
      %s212 = scalar_select %p211, %s208, 1
      %s213 = smul.addr %s210, 2
      %s214 = sadd.s32 %s212, %s213
      %s215 = smul.addr %s214, 8
      %s216 = scalar_lea.vmem %s2, %s215
      %s217 = smul.u32 2, %s19
      %p218 = scmp.eq.s32.totalorder %s20, 0
      // Predicated region
      $region29: #{loss_fn.3} parent=27 // pred_check
        %p219 = pneg %p218
      $region30: #{loss_fn.3} parent=27 // pred_check_branch
        %221 = sbr.rel (%p219) target = $region32
      $region31: #{loss_fn.3} parent=27 // pred_region
        %vm222 = vcmask 80896
        %223 = vst.msk [vmem:[#allocation2] sm:$0xff] %vm222, inf
        %224 = vst.msk [vmem:[#allocation2 + $0x8] sm:$0xff] %vm222, inf
      $region32: #{loss_fn.3} parent=27 // pred_fallthru
        _
      %v225 = vld [vmem:[%s199] sm:$0xff]
      %v226 = vld [vmem:[%s199 + $0x8] sm:$0xff]
      %v227 = vld [vmem:[%s207] sm:$0x1]
      %229 = vset.pattern.permute.xlu0 0
      %230 = vperm.xlu0 %229, %v225
      %v231 = vpop.permute.xlu0 %230
      %234 = vset.pattern.permute.xlu0 0
      %235 = vperm.xlu0 %234, %v226
      %v236 = vpop.permute.xlu0 %235
      %v238 = vlaneseq
      %v239 = vshrl.u32 %v238, 7
      %v240 = vsub.s32 0, %v239
      %v241 = vrot.slane %v227, %v240
      %v242 = vsub.f32 %v231, %v241
      %v243 = vsub.f32 %v236, %v241
      %v244 = vmul.f32 %v242, %v242
      %v245 = vmul.f32 %v243, %v243
      %v246 = vadd.f32 %v244, 0.0
      %v247 = vadd.f32 %v245, 0.0
      %v248 = vld [vmem:[%s207 + $0x1] sm:$0x1]
      %249 = vset.pattern.permute.xlu0 1
      %250 = vperm.xlu0 %249, %v225
      %v251 = vpop.permute.xlu0 %250
      %253 = vset.pattern.permute.xlu0 1
      %254 = vperm.xlu0 %253, %v226
      %v255 = vpop.permute.xlu0 %254
      %v257 = vlaneseq
      %v258 = vshrl.u32 %v257, 7
      %v259 = vsub.s32 0, %v258
      %v260 = vrot.slane %v248, %v259
      %v261 = vsub.f32 %v251, %v260
      %v262 = vsub.f32 %v255, %v260
      %v263 = vmul.f32 %v261, %v261
      %v264 = vmul.f32 %v262, %v262
      %v265 = vadd.f32 %v246, %v263
      %v266 = vadd.f32 %v247, %v264
      %v267 = vld [vmem:[%s207 + $0x2] sm:$0x1]
      %268 = vset.pattern.permute.xlu0 2
      %269 = vperm.xlu0 %268, %v225
      %v270 = vpop.permute.xlu0 %269
      %272 = vset.pattern.permute.xlu0 2
      %273 = vperm.xlu0 %272, %v226
      %v274 = vpop.permute.xlu0 %273
      %v276 = vlaneseq
      %v277 = vshrl.u32 %v276, 7
      %v278 = vsub.s32 0, %v277
      %v279 = vrot.slane %v267, %v278
      %v280 = vsub.f32 %v270, %v279
      %v281 = vsub.f32 %v274, %v279
      %v282 = vmul.f32 %v280, %v280
      %v283 = vmul.f32 %v281, %v281
      %v284 = vadd.f32 %v265, %v282
      %v285 = vadd.f32 %v266, %v283
      %v286 = vld [vmem:[#allocation2] sm:$0xff]
      %v287 = vld [vmem:[#allocation2 + $0x8] sm:$0xff]
      %290 = vrot.lane.b32.xlu0 %v284, 10
      %v291 = vpop.permute.xlu0 %290
      %292 = vrot.lane.b32.xlu0 %v285, 10
      %v293 = vpop.permute.xlu0 %292
      %vm296 = vcmask 80896
      %v297 = vsel %vm296, %v286, %v291
      %v298 = vsel %vm296, %v287, %v293
      %v299 = vlaneseq
      %v300 = vand.u32 %v299, 127
      %vm301 = vcmask 211968
      %v302 = vsel %vm301, %v297, inf
      %303 = vmin.xlane.f32.xlu0 %v302
      %v304 = vpop.xlane.xlu0 %303
      %v305 = vsel %vm301, %v298, inf
      %306 = vmin.xlane.f32.xlu0 %v305
      %v307 = vpop.xlane.xlu0 %306
      %vm308 = vcmp.le.f32.partialorder %v297, %v304
      %vm309 = vcmp.le.f32.partialorder %v298, %v307
      %v310 = vsel %vm308, %v300, 26
      %v311 = vsel %vm309, %v300, 26
      %v312 = vsel %vm301, %v310, 2147483647
      %v313 = vand.u32 %v312, 65535
      %v314 = vshra.s32 %v312, 16
      %v315 = vcvt.s32.f32 %v313
      %v316 = vcvt.s32.f32 %v314
      %317 = vmin.xlane.f32.xlu0 %v316
      %v318 = vpop.xlane.xlu0 %317
      %vm319 = vcmp.eq.f32.partialorder %v316, %v318
      %v320 = vsel %vm319, %v315, inf
      %321 = vmin.xlane.f32.xlu0 %v320
      %v322 = vpop.xlane.xlu0 %321
      %v323 = vcvt.f32.s32 %v322
      %v324 = vcvt.f32.s32 %v318
      %v325 = vshll.u32 %v324, 16
      %v326 = vadd.s32 %v325, %v323
      %v327 = vsel %vm301, %v311, 2147483647
      %v328 = vand.u32 %v327, 65535
      %v329 = vshra.s32 %v327, 16
      %v330 = vcvt.s32.f32 %v328
      %v331 = vcvt.s32.f32 %v329
      %332 = vmin.xlane.f32.xlu0 %v331
      %v333 = vpop.xlane.xlu0 %332
      %vm334 = vcmp.eq.f32.partialorder %v331, %v333
      %v335 = vsel %vm334, %v330, inf
      %336 = vmin.xlane.f32.xlu0 %v335
      %v337 = vpop.xlane.xlu0 %336
      %v338 = vcvt.f32.s32 %v337
      %v339 = vcvt.f32.s32 %v333
      %v340 = vshll.u32 %v339, 16
      %v341 = vadd.s32 %v340, %v338
      %vm342 = vcmp.eq.s32.totalorder %v300, %v326
      %vm343 = vcmp.eq.s32.totalorder %v300, %v341
      %v344 = vsel %vm342, inf, %v297
      %v345 = vsel %vm343, inf, %v298
      %v346 = vsel %vm301, %v344, inf
      %347 = vmin.xlane.f32.xlu0 %v346
      %v348 = vpop.xlane.xlu0 %347
      %v349 = vsel %vm301, %v345, inf
      %350 = vmin.xlane.f32.xlu0 %v349
      %v351 = vpop.xlane.xlu0 %350
      %vm352 = vcmp.le.f32.partialorder %v344, %v348
      %vm353 = vcmp.le.f32.partialorder %v345, %v351
      %v354 = vsel %vm352, %v300, 26
      %v355 = vsel %vm353, %v300, 26
      %v356 = vsel %vm301, %v354, 2147483647
      %v357 = vand.u32 %v356, 65535
      %v358 = vshra.s32 %v356, 16
      %v359 = vcvt.s32.f32 %v357
      %v360 = vcvt.s32.f32 %v358
      %361 = vmin.xlane.f32.xlu0 %v360
      %v362 = vpop.xlane.xlu0 %361
      %vm363 = vcmp.eq.f32.partialorder %v360, %v362
      %v364 = vsel %vm363, %v359, inf
      %365 = vmin.xlane.f32.xlu0 %v364
      %v366 = vpop.xlane.xlu0 %365
      %v367 = vcvt.f32.s32 %v366
      %v368 = vcvt.f32.s32 %v362
      %v369 = vshll.u32 %v368, 16
      %v370 = vadd.s32 %v369, %v367
      %v371 = vsel %vm301, %v355, 2147483647
      %v372 = vand.u32 %v371, 65535
      %v373 = vshra.s32 %v371, 16
      %v374 = vcvt.s32.f32 %v372
      %v375 = vcvt.s32.f32 %v373
      %376 = vmin.xlane.f32.xlu0 %v375
      %v377 = vpop.xlane.xlu0 %376
      %vm378 = vcmp.eq.f32.partialorder %v375, %v377
      %v379 = vsel %vm378, %v374, inf
      %380 = vmin.xlane.f32.xlu0 %v379
      %v381 = vpop.xlane.xlu0 %380
      %v382 = vcvt.f32.s32 %v381
      %v383 = vcvt.f32.s32 %v377
      %v384 = vshll.u32 %v383, 16
      %v385 = vadd.s32 %v384, %v382
      %vm386 = vcmp.eq.s32.totalorder %v300, %v370
      %vm387 = vcmp.eq.s32.totalorder %v300, %v385
      %v388 = vsel %vm386, inf, %v344
      %v389 = vsel %vm387, inf, %v345
      %v390 = vsel %vm301, %v388, inf
      %391 = vmin.xlane.f32.xlu0 %v390
      %v392 = vpop.xlane.xlu0 %391
      %v393 = vsel %vm301, %v389, inf
      %394 = vmin.xlane.f32.xlu0 %v393
      %v395 = vpop.xlane.xlu0 %394
      %vm396 = vcmp.le.f32.partialorder %v388, %v392
      %vm397 = vcmp.le.f32.partialorder %v389, %v395
      %v398 = vsel %vm396, %v300, 26
      %v399 = vsel %vm397, %v300, 26
      %v400 = vsel %vm301, %v398, 2147483647
      %v401 = vand.u32 %v400, 65535
      %v402 = vshra.s32 %v400, 16
      %v403 = vcvt.s32.f32 %v401
      %v404 = vcvt.s32.f32 %v402
      %405 = vmin.xlane.f32.xlu0 %v404
      %v406 = vpop.xlane.xlu0 %405
      %vm407 = vcmp.eq.f32.partialorder %v404, %v406
      %v408 = vsel %vm407, %v403, inf
      %409 = vmin.xlane.f32.xlu0 %v408
      %v410 = vpop.xlane.xlu0 %409
      %v411 = vcvt.f32.s32 %v410
      %v412 = vcvt.f32.s32 %v406
      %v413 = vshll.u32 %v412, 16
      %v414 = vadd.s32 %v413, %v411
      %v415 = vsel %vm301, %v399, 2147483647
      %v416 = vand.u32 %v415, 65535
      %v417 = vshra.s32 %v415, 16
      %v418 = vcvt.s32.f32 %v416
      %v419 = vcvt.s32.f32 %v417
      %420 = vmin.xlane.f32.xlu0 %v419
      %v421 = vpop.xlane.xlu0 %420
      %vm422 = vcmp.eq.f32.partialorder %v419, %v421
      %v423 = vsel %vm422, %v418, inf
      %424 = vmin.xlane.f32.xlu0 %v423
      %v425 = vpop.xlane.xlu0 %424
      %v426 = vcvt.f32.s32 %v425
      %v427 = vcvt.f32.s32 %v421
      %v428 = vshll.u32 %v427, 16
      %v429 = vadd.s32 %v428, %v426
      %vm430 = vcmp.eq.s32.totalorder %v300, %v414
      %vm431 = vcmp.eq.s32.totalorder %v300, %v429
      %v432 = vsel %vm430, inf, %v388
      %v433 = vsel %vm431, inf, %v389
      %v434 = vsel %vm301, %v432, inf
      %435 = vmin.xlane.f32.xlu0 %v434
      %v436 = vpop.xlane.xlu0 %435
      %v437 = vsel %vm301, %v433, inf
      %438 = vmin.xlane.f32.xlu0 %v437
      %v439 = vpop.xlane.xlu0 %438
      %vm440 = vcmp.le.f32.partialorder %v432, %v436
      %vm441 = vcmp.le.f32.partialorder %v433, %v439
      %v442 = vsel %vm440, %v300, 26
      %v443 = vsel %vm441, %v300, 26
      %v444 = vsel %vm301, %v442, 2147483647
      %v445 = vand.u32 %v444, 65535
      %v446 = vshra.s32 %v444, 16
      %v447 = vcvt.s32.f32 %v445
      %v448 = vcvt.s32.f32 %v446
      %449 = vmin.xlane.f32.xlu0 %v448
      %v450 = vpop.xlane.xlu0 %449
      %vm451 = vcmp.eq.f32.partialorder %v448, %v450
      %v452 = vsel %vm451, %v447, inf
      %453 = vmin.xlane.f32.xlu0 %v452
      %v454 = vpop.xlane.xlu0 %453
      %v455 = vcvt.f32.s32 %v454
      %v456 = vcvt.f32.s32 %v450
      %v457 = vshll.u32 %v456, 16
      %v458 = vadd.s32 %v457, %v455
      %v459 = vsel %vm301, %v443, 2147483647
      %v460 = vand.u32 %v459, 65535
      %v461 = vshra.s32 %v459, 16
      %v462 = vcvt.s32.f32 %v460
      %v463 = vcvt.s32.f32 %v461
      %464 = vmin.xlane.f32.xlu0 %v463
      %v465 = vpop.xlane.xlu0 %464
      %vm466 = vcmp.eq.f32.partialorder %v463, %v465
      %v467 = vsel %vm466, %v462, inf
      %468 = vmin.xlane.f32.xlu0 %v467
      %v469 = vpop.xlane.xlu0 %468
      %v470 = vcvt.f32.s32 %v469
      %v471 = vcvt.f32.s32 %v465
      %v472 = vshll.u32 %v471, 16
      %v473 = vadd.s32 %v472, %v470
      %vm474 = vcmp.eq.s32.totalorder %v300, %v458
      %vm475 = vcmp.eq.s32.totalorder %v300, %v473
      %v476 = vsel %vm474, inf, %v432
      %v477 = vsel %vm475, inf, %v433
      %v478 = vsel %vm301, %v476, inf
      %479 = vmin.xlane.f32.xlu0 %v478
      %v480 = vpop.xlane.xlu0 %479
      %v481 = vsel %vm301, %v477, inf
      %482 = vmin.xlane.f32.xlu0 %v481
      %v483 = vpop.xlane.xlu0 %482
      %vm484 = vcmp.le.f32.partialorder %v476, %v480
      %vm485 = vcmp.le.f32.partialorder %v477, %v483
      %v486 = vsel %vm484, %v300, 26
      %v487 = vsel %vm485, %v300, 26
      %v488 = vsel %vm301, %v486, 2147483647
      %v489 = vand.u32 %v488, 65535
      %v490 = vshra.s32 %v488, 16
      %v491 = vcvt.s32.f32 %v489
      %v492 = vcvt.s32.f32 %v490
      %493 = vmin.xlane.f32.xlu0 %v492
      %v494 = vpop.xlane.xlu0 %493
      %vm495 = vcmp.eq.f32.partialorder %v492, %v494
      %v496 = vsel %vm495, %v491, inf
      %497 = vmin.xlane.f32.xlu0 %v496
      %v498 = vpop.xlane.xlu0 %497
      %v499 = vcvt.f32.s32 %v498
      %v500 = vcvt.f32.s32 %v494
      %v501 = vshll.u32 %v500, 16
      %v502 = vadd.s32 %v501, %v499
      %v503 = vsel %vm301, %v487, 2147483647
      %v504 = vand.u32 %v503, 65535
      %v505 = vshra.s32 %v503, 16
      %v506 = vcvt.s32.f32 %v504
      %v507 = vcvt.s32.f32 %v505
      %508 = vmin.xlane.f32.xlu0 %v507
      %v509 = vpop.xlane.xlu0 %508
      %vm510 = vcmp.eq.f32.partialorder %v507, %v509
      %v511 = vsel %vm510, %v506, inf
      %512 = vmin.xlane.f32.xlu0 %v511
      %v513 = vpop.xlane.xlu0 %512
      %v514 = vcvt.f32.s32 %v513
      %v515 = vcvt.f32.s32 %v509
      %v516 = vshll.u32 %v515, 16
      %v517 = vadd.s32 %v516, %v514
      %vm518 = vcmp.eq.s32.totalorder %v300, %v502
      %vm519 = vcmp.eq.s32.totalorder %v300, %v517
      %v520 = vsel %vm518, inf, %v476
      %v521 = vsel %vm519, inf, %v477
      %v522 = vsel %vm301, %v520, inf
      %523 = vmin.xlane.f32.xlu0 %v522
      %v524 = vpop.xlane.xlu0 %523
      %v525 = vsel %vm301, %v521, inf
      %526 = vmin.xlane.f32.xlu0 %v525
      %v527 = vpop.xlane.xlu0 %526
      %vm528 = vcmp.le.f32.partialorder %v520, %v524
      %vm529 = vcmp.le.f32.partialorder %v521, %v527
      %v530 = vsel %vm528, %v300, 26
      %v531 = vsel %vm529, %v300, 26
      %v532 = vsel %vm301, %v530, 2147483647
      %v533 = vand.u32 %v532, 65535
      %v534 = vshra.s32 %v532, 16
      %v535 = vcvt.s32.f32 %v533
      %v536 = vcvt.s32.f32 %v534
      %537 = vmin.xlane.f32.xlu0 %v536
      %v538 = vpop.xlane.xlu0 %537
      %vm539 = vcmp.eq.f32.partialorder %v536, %v538
      %v540 = vsel %vm539, %v535, inf
      %541 = vmin.xlane.f32.xlu0 %v540
      %v542 = vpop.xlane.xlu0 %541
      %v543 = vcvt.f32.s32 %v542
      %v544 = vcvt.f32.s32 %v538
      %v545 = vshll.u32 %v544, 16
      %v546 = vadd.s32 %v545, %v543
      %v547 = vsel %vm301, %v531, 2147483647
      %v548 = vand.u32 %v547, 65535
      %v549 = vshra.s32 %v547, 16
      %v550 = vcvt.s32.f32 %v548
      %v551 = vcvt.s32.f32 %v549
      %552 = vmin.xlane.f32.xlu0 %v551
      %v553 = vpop.xlane.xlu0 %552
      %vm554 = vcmp.eq.f32.partialorder %v551, %v553
      %v555 = vsel %vm554, %v550, inf
      %556 = vmin.xlane.f32.xlu0 %v555
      %v557 = vpop.xlane.xlu0 %556
      %v558 = vcvt.f32.s32 %v557
      %v559 = vcvt.f32.s32 %v553
      %v560 = vshll.u32 %v559, 16
      %v561 = vadd.s32 %v560, %v558
      %vm562 = vcmp.eq.s32.totalorder %v300, %v546
      %vm563 = vcmp.eq.s32.totalorder %v300, %v561
      %v564 = vsel %vm562, inf, %v520
      %v565 = vsel %vm563, inf, %v521
      %v566 = vsel %vm301, %v564, inf
      %567 = vmin.xlane.f32.xlu0 %v566
      %v568 = vpop.xlane.xlu0 %567
      %v569 = vsel %vm301, %v565, inf
      %570 = vmin.xlane.f32.xlu0 %v569
      %v571 = vpop.xlane.xlu0 %570
      %vm572 = vcmp.le.f32.partialorder %v564, %v568
      %vm573 = vcmp.le.f32.partialorder %v565, %v571
      %v574 = vsel %vm572, %v300, 26
      %v575 = vsel %vm573, %v300, 26
      %v576 = vsel %vm301, %v574, 2147483647
      %v577 = vand.u32 %v576, 65535
      %v578 = vshra.s32 %v576, 16
      %v579 = vcvt.s32.f32 %v577
      %v580 = vcvt.s32.f32 %v578
      %581 = vmin.xlane.f32.xlu0 %v580
      %v582 = vpop.xlane.xlu0 %581
      %vm583 = vcmp.eq.f32.partialorder %v580, %v582
      %v584 = vsel %vm583, %v579, inf
      %585 = vmin.xlane.f32.xlu0 %v584
      %v586 = vpop.xlane.xlu0 %585
      %v587 = vcvt.f32.s32 %v586
      %v588 = vcvt.f32.s32 %v582
      %v589 = vshll.u32 %v588, 16
      %v590 = vadd.s32 %v589, %v587
      %v591 = vsel %vm301, %v575, 2147483647
      %v592 = vand.u32 %v591, 65535
      %v593 = vshra.s32 %v591, 16
      %v594 = vcvt.s32.f32 %v592
      %v595 = vcvt.s32.f32 %v593
      %596 = vmin.xlane.f32.xlu0 %v595
      %v597 = vpop.xlane.xlu0 %596
      %vm598 = vcmp.eq.f32.partialorder %v595, %v597
      %v599 = vsel %vm598, %v594, inf
      %600 = vmin.xlane.f32.xlu0 %v599
      %v601 = vpop.xlane.xlu0 %600
      %v602 = vcvt.f32.s32 %v601
      %v603 = vcvt.f32.s32 %v597
      %v604 = vshll.u32 %v603, 16
      %v605 = vadd.s32 %v604, %v602
      %vm606 = vcmp.eq.s32.totalorder %v300, %v590
      %vm607 = vcmp.eq.s32.totalorder %v300, %v605
      %v608 = vsel %vm606, inf, %v564
      %v609 = vsel %vm607, inf, %v565
      %v610 = vsel %vm301, %v608, inf
      %611 = vmin.xlane.f32.xlu0 %v610
      %v612 = vpop.xlane.xlu0 %611
      %v613 = vsel %vm301, %v609, inf
      %614 = vmin.xlane.f32.xlu0 %v613
      %v615 = vpop.xlane.xlu0 %614
      %vm616 = vcmp.le.f32.partialorder %v608, %v612
      %vm617 = vcmp.le.f32.partialorder %v609, %v615
      %v618 = vsel %vm616, %v300, 26
      %v619 = vsel %vm617, %v300, 26
      %v620 = vsel %vm301, %v618, 2147483647
      %v621 = vand.u32 %v620, 65535
      %v622 = vshra.s32 %v620, 16
      %v623 = vcvt.s32.f32 %v621
      %v624 = vcvt.s32.f32 %v622
      %625 = vmin.xlane.f32.xlu0 %v624
      %v626 = vpop.xlane.xlu0 %625
      %vm627 = vcmp.eq.f32.partialorder %v624, %v626
      %v628 = vsel %vm627, %v623, inf
      %629 = vmin.xlane.f32.xlu0 %v628
      %v630 = vpop.xlane.xlu0 %629
      %v631 = vcvt.f32.s32 %v630
      %v632 = vcvt.f32.s32 %v626
      %v633 = vshll.u32 %v632, 16
      %v634 = vadd.s32 %v633, %v631
      %v635 = vsel %vm301, %v619, 2147483647
      %v636 = vand.u32 %v635, 65535
      %v637 = vshra.s32 %v635, 16
      %v638 = vcvt.s32.f32 %v636
      %v639 = vcvt.s32.f32 %v637
      %640 = vmin.xlane.f32.xlu0 %v639
      %v641 = vpop.xlane.xlu0 %640
      %vm642 = vcmp.eq.f32.partialorder %v639, %v641
      %v643 = vsel %vm642, %v638, inf
      %644 = vmin.xlane.f32.xlu0 %v643
      %v645 = vpop.xlane.xlu0 %644
      %v646 = vcvt.f32.s32 %v645
      %v647 = vcvt.f32.s32 %v641
      %v648 = vshll.u32 %v647, 16
      %v649 = vadd.s32 %v648, %v646
      %vm650 = vcmp.eq.s32.totalorder %v300, %v634
      %vm651 = vcmp.eq.s32.totalorder %v300, %v649
      %v652 = vsel %vm650, inf, %v608
      %v653 = vsel %vm651, inf, %v609
      %v654 = vsel %vm301, %v652, inf
      %655 = vmin.xlane.f32.xlu0 %v654
      %v656 = vpop.xlane.xlu0 %655
      %v657 = vsel %vm301, %v653, inf
      %658 = vmin.xlane.f32.xlu0 %v657
      %v659 = vpop.xlane.xlu0 %658
      %vm660 = vcmp.le.f32.partialorder %v652, %v656
      %vm661 = vcmp.le.f32.partialorder %v653, %v659
      %v662 = vsel %vm660, %v300, 26
      %v663 = vsel %vm661, %v300, 26
      %v664 = vsel %vm301, %v662, 2147483647
      %v665 = vand.u32 %v664, 65535
      %v666 = vshra.s32 %v664, 16
      %v667 = vcvt.s32.f32 %v665
      %v668 = vcvt.s32.f32 %v666
      %669 = vmin.xlane.f32.xlu0 %v668
      %v670 = vpop.xlane.xlu0 %669
      %vm671 = vcmp.eq.f32.partialorder %v668, %v670
      %v672 = vsel %vm671, %v667, inf
      %673 = vmin.xlane.f32.xlu0 %v672
      %v674 = vpop.xlane.xlu0 %673
      %v675 = vcvt.f32.s32 %v674
      %v676 = vcvt.f32.s32 %v670
      %v677 = vshll.u32 %v676, 16
      %v678 = vadd.s32 %v677, %v675
      %v679 = vsel %vm301, %v663, 2147483647
      %v680 = vand.u32 %v679, 65535
      %v681 = vshra.s32 %v679, 16
      %v682 = vcvt.s32.f32 %v680
      %v683 = vcvt.s32.f32 %v681
      %684 = vmin.xlane.f32.xlu0 %v683
      %v685 = vpop.xlane.xlu0 %684
      %vm686 = vcmp.eq.f32.partialorder %v683, %v685
      %v687 = vsel %vm686, %v682, inf
      %688 = vmin.xlane.f32.xlu0 %v687
      %v689 = vpop.xlane.xlu0 %688
      %v690 = vcvt.f32.s32 %v689
      %v691 = vcvt.f32.s32 %v685
      %v692 = vshll.u32 %v691, 16
      %v693 = vadd.s32 %v692, %v690
      %vm694 = vcmp.eq.s32.totalorder %v300, %v678
      %vm695 = vcmp.eq.s32.totalorder %v300, %v693
      %v696 = vsel %vm694, inf, %v652
      %v697 = vsel %vm695, inf, %v653
      %v698 = vsel %vm301, %v696, inf
      %699 = vmin.xlane.f32.xlu0 %v698
      %v700 = vpop.xlane.xlu0 %699
      %v701 = vsel %vm301, %v697, inf
      %702 = vmin.xlane.f32.xlu0 %v701
      %v703 = vpop.xlane.xlu0 %702
      %vm704 = vcmask 7168
      %v705 = vsel %vm704, %v304, %v348
      %v706 = vsel %vm704, %v307, %v351
      %vm707 = vcmask 15360
      %v708 = vsel %vm707, %v705, %v392
      %v709 = vsel %vm707, %v706, %v395
      %vm710 = vcmask 23552
      %v711 = vsel %vm710, %v708, %v436
      %v712 = vsel %vm710, %v709, %v439
      %vm713 = vcmask 31744
      %v714 = vsel %vm713, %v711, %v480
      %v715 = vsel %vm713, %v712, %v483
      %vm716 = vcmask 39936
      %v717 = vsel %vm716, %v714, %v524
      %v718 = vsel %vm716, %v715, %v527
      %vm719 = vcmask 48128
      %v720 = vsel %vm719, %v717, %v568
      %v721 = vsel %vm719, %v718, %v571
      %vm722 = vcmask 56320
      %v723 = vsel %vm722, %v720, %v612
      %v724 = vsel %vm722, %v721, %v615
      %vm725 = vcmask 64512
      %v726 = vsel %vm725, %v723, %v656
      %v727 = vsel %vm725, %v724, %v659
      %vm728 = vcmask 72704
      %v729 = vsel %vm728, %v726, %v700
      %v730 = vsel %vm728, %v727, %v703
      %731 = vst.msk [vmem:[#allocation2] sm:$0xff] %vm296, %v729
      %732 = vst.msk [vmem:[#allocation2 + $0x8] sm:$0xff] %vm296, %v730
      // Predicated region
      $region33: #{loss_fn.3} parent=27 // pred_check
        %p733 = pneg %p218
      $region34: #{loss_fn.3} parent=27 // pred_check_branch
        %735 = sbr.rel (%p733) target = $region36
      $region35: #{loss_fn.3} parent=27 // pred_region
        %v736 = vld [vmem:[#allocation2] sm:$0xff]
        %v737 = vld [vmem:[#allocation2 + $0x8] sm:$0xff]
        %738 = vst.msk [vmem:[%s216] sm:$0xff] %vm296, %v736
        %739 = vst.msk [vmem:[%s216 + $0x8] sm:$0xff] %vm296, %v737
      $region36: #{loss_fn.3} parent=27 // pred_fallthru
        _
      %s740 = smul.u32 2, %s19
      %p741 = scmp.lt.s32.totalorder %s18, 1
      %s742 = scalar_select %p741, %s18, 1
      %p743 = scmp.lt.s32.totalorder %s740, 1
      %s744 = scalar_select %p743, %s740, 1
      %s745 = smul.addr %s742, 2
      %s746 = sadd.s32 %s744, %s745
      %s747 = smul.addr %s746, 8
      %s748 = scalar_lea.vmem %s2, %s747
      // Predicated region
      $region37: #{loss_fn.3} parent=27 // pred_check
        %p749 = pneg %p108
      $region38: #{loss_fn.3} parent=27 // pred_check_branch
        %751 = sbr.rel (%p749) target = $region40
      $region39: #{loss_fn.3} parent=27 // pred_region
        %s752 = smul.u32 2, %s19
      $region40: #{loss_fn.3} parent=27 // pred_fallthru
        _
    $region28: #{loss_fn.3} parent=5 // pred_fallthru
      _
    %p753 = scmp.le.s32.totalorder 2, %s8
    // Predicated region
    $region41: #{loss_fn.3} parent=5 // pred_check
      %p754 = pneg %p753
    $region42: #{loss_fn.3} parent=5 // pred_check_branch
      %756 = sbr.rel (%p754) target = $region44
    $region43: #{loss_fn.3} parent=5 // pred_region
      %s757 = ssub.s32 %s8, 2
      // Predicated region
      $region45: #{loss_fn.3} parent=43 // pred_check
        %p758 = pneg %p114
      $region46: #{loss_fn.3} parent=43 // pred_check_branch
        %760 = sbr.rel (%p758) target = $region48
      $region47: #{loss_fn.3} parent=43 // pred_region
        %s761 = smul.u32 2, %s22
        %p762 = scmp.lt.s32.totalorder %s21, 1
        %s763 = scalar_select %p762, %s21, 1
        %p764 = scmp.lt.s32.totalorder %s761, 1
        %s765 = scalar_select %p764, %s761, 1
        %s766 = smul.addr %s763, 2
        %s767 = sadd.s32 %s765, %s766
        %s768 = smul.addr %s767, 8
        %s769 = scalar_lea.vmem %s2, %s768
      $region48: #{loss_fn.3} parent=43 // pred_fallthru
        _
    $region44: #{loss_fn.3} parent=5 // pred_fallthru
      _
  $region6: #{loss_fn.3} parent=0 // loop_footer
    %s12 = sadd.s32 1, %s8
  $region7: #{loss_fn.3} parent=0 // loop_footer_branch
    %7 = sbr.rel target = $region3
  $region8: #{loss_fn.3} parent=0 // loop_exit
    _

</llo_original>
